<compile_context>
chip_gen: v7x
topology: tpu7x:2x2x1
jax: 0.10.0
libtpu: 0.0.40
codegen_flags: <defaults>
</compile_context>

<pallas_src>
import functools

import jax
import jax.numpy as jnp
from jax.experimental import pallas as pl
from jax.experimental.pallas import tpu as pltpu

NEG_SLOPE = 0.01                # nn.LeakyReLU default
BN_EPS = 1e-5                   # nn.BatchNorm3d default
VMEM_LIMIT = 32 * 1024 * 1024   # safe on v5e/v6e (128 MiB) and v7x (64 MiB)
MATMUL_DTYPE = jnp.bfloat16     # MXU-native on v6e/v7x; set jnp.float32 for exact f32


# --------------------------------------------------------------------------
# Kernels
# --------------------------------------------------------------------------
def _conv_stats_kernel(x_ref, w_ref, b_ref, y_ref, s_ref, ss_ref):
    """One big lane-dense MXU matmul + BN partial sums (single grid step).

    x_ref : (M, K)         im2col slab, M = N*T_out*H_out, K = kt*kh*Wp*Cin (bf16)
    w_ref : (K, W*Cout)    banded weights (kw taps + Cin folded into K)     (bf16)
    b_ref : (1, W*Cout)    bias tiled over W                                (f32)
    y_ref : (M, W*Cout)    raw conv output (+bias), pre-BN                  (f32)
    s_ref, ss_ref : (1, W*Cout)  sums / sums of squares over all M rows     (f32)
    """
    acc = jnp.dot(x_ref[...], w_ref[...], preferred_element_type=jnp.float32)
    acc = acc + b_ref[...]
    y_ref[...] = acc
    s_ref[...] = jnp.sum(acc, axis=0, keepdims=True)
    # Single-pass E[x^2]-E[x]^2 variance (clamped later); fine at these
    # activation magnitudes, diverges from two-pass only when |mean| >> std.
    ss_ref[...] = jnp.sum(acc * acc, axis=0, keepdims=True)


def _bn_lrelu_kernel(y_ref, sc_ref, sh_ref, o_ref):
    """Per-sample full-T fused BatchNorm affine + LeakyReLU (kt == 2 path)."""
    a = y_ref[...] * sc_ref[...] + sh_ref[...]
    o_ref[...] = jnp.where(a >= 0, a, NEG_SLOPE * a)


def _residual_epilogue_kernel(y1_ref, y2_ref, sc1_ref, sh1_ref, sc2_ref,
                              sh2_ref, o_ref, *, t1, t2):
    """Fused BN+LeakyReLU (both branches) + residual sub + repl-pad + concat.

    y1_ref : (1, t1, H, W*C)   raw conv branch output       (t1 = T - kt + 1)
    y2_ref : (1, t2, H, W*C)   raw conv_k2 branch output    (t2 = kt - 1)
    o_ref  : (1, t1+t2, H, W*C) = (1, T, H, W*C)
    Frame selection / temporal replication via static in-kernel slices.
    """
    a1 = y1_ref[...] * sc1_ref[...] + sh1_ref[...]
    a1 = jnp.where(a1 >= 0, a1, NEG_SLOPE * a1)
    a2 = y2_ref[...] * sc2_ref[...] + sh2_ref[...]
    a2 = jnp.where(a2 >= 0, a2, NEG_SLOPE * a2)

    t_split = t1 - 1                            # = T - kt
    if t_split > 0:
        o_ref[:, :t_split] = a1[:, :t_split]    # untouched leading conv frames
    last = a1[:, t_split:t_split + 1]           # last conv frame (1,1,H,W*C)
    o_ref[:, t_split:t_split + t2] = last - a2
    # ReplicationPad3d((0,0,0,0,0,1)): the last conv_k2 frame is reused once.
    o_ref[:, t_split + t2:] = last - a2[:, t2 - 1:t2]


# --------------------------------------------------------------------------
# Wrappers
# --------------------------------------------------------------------------
def _make_band_weights(wl, wp, w_out):
    """wl: (kt, kh, kw, cin, cout) -> banded (kt*kh, wp*cin, w_out*cout).

    band[dt,dh, win*cin+ci, w*cout+co] = wl[dt,dh, win-w, ci, co] if
    0 <= win-w < kw else 0, so the kw sliding window + channel contraction
    become a single dense K dim of an MXU matmul with lane-dense output.
    """
    kt, kh, kw, cin, cout = wl.shape
    win = jnp.arange(wp)
    wo = jnp.arange(w_out)
    dwi = jnp.arange(kw)
    onehot = (win[None, None, :] == (wo[:, None, None] + dwi[None, :, None]))
    onehot = onehot.astype(wl.dtype)                   # (w_out, kw, wp)
    band = jnp.einsum('wdp,tkdic->tkpiwc', onehot, wl)
    return band.reshape(kt * kh, wp * cin, w_out * cout)


def conv3d_im2col(x, w, b, pad_hw):
    """Valid-T / padded-HW Conv3d as ONE lane-dense MXU matmul (+ BN sums).

    x: (N, Cin, T, H, W) NCDHW; w: (Cout, Cin, kt, kh, kw); b: (Cout,).
    Returns raw conv output (N, T_out, H_out, W_out*Cout) and the BN partial
    sums over all N*T_out*H_out rows.
    """
    n, cin, t, h, wdim = x.shape
    cout, _, kt, kh, kw = w.shape
    ph, pw = pad_hw
    t_out = t - kt + 1
    h_out = h + 2 * ph - kh + 1
    w_out = wdim + 2 * pw - kw + 1
    wp = wdim + 2 * pw
    wcout = w_out * cout
    k_dim = kt * kh * wp * cin
    m_rows = n * t_out * h_out

    xl = jnp.transpose(x, (0, 2, 3, 4, 1)).astype(jnp.float32)        # NDHWC
    xp = jnp.pad(xl, ((0, 0), (0, 0), (ph, ph), (pw, pw), (0, 0)))    # zero pad
    # im2col over the (kt, kh) taps, built once by XLA; the kw taps live inside
    # the banded weight matrix so the output stays lane-dense (W*Cout lanes)
    # and no sublane-unaligned slicing happens inside the kernel.
    taps = [xp[:, dt:dt + t_out, dh:dh + h_out]
            for dt in range(kt) for dh in range(kh)]
    xcol = jnp.stack(taps, axis=3).reshape(m_rows, k_dim).astype(MATMUL_DTYPE)

    wl = jnp.transpose(w, (2, 3, 4, 1, 0)).astype(jnp.float32)        # (kt,kh,kw,ci,co)
    wband = _make_band_weights(wl, wp, w_out).reshape(k_dim, wcout)
    wband = wband.astype(MATMUL_DTYPE)
    btile = jnp.tile(b.astype(jnp.float32), w_out).reshape(1, wcout)

    # Single invocation, whole arrays as VMEM blocks (M=192, K=648 here: ~0.5 MiB).
    # TODO(synk): if shapes grow, tile M with a "parallel" grid axis and
    # re-derive block sizes against v7x's 64 MiB VMEM.
    y, s, ss = pl.pallas_call(
        _conv_stats_kernel,
        out_shape=(
            jax.ShapeDtypeStruct((m_rows, wcout), jnp.float32),
            jax.ShapeDtypeStruct((1, wcout), jnp.float32),
            jax.ShapeDtypeStruct((1, wcout), jnp.float32),
        ),
        compiler_params=pltpu.CompilerParams(vmem_limit_bytes=VMEM_LIMIT),
    )(xcol, wband, btile)
    return y.reshape(n, t_out, h_out, wcout), s, ss, (t_out, h_out, w_out, cout)


def _bn_scale_shift(s, ss, count, w_out, cout, gamma, beta):
    """Fold kernel BN sums into lane-tiled scale/shift rows (tiny JAX glue)."""
    tot_s = s.reshape(w_out, cout).sum(axis=0)
    tot_ss = ss.reshape(w_out, cout).sum(axis=0)
    mean = tot_s / count
    var = jnp.maximum(tot_ss / count - mean * mean, 0.0)     # biased batch var
    scale = gamma.astype(jnp.float32) / jnp.sqrt(var + BN_EPS)
    shift = beta.astype(jnp.float32) - mean * scale
    return (jnp.tile(scale, w_out).reshape(1, w_out * cout),
            jnp.tile(shift, w_out).reshape(1, w_out * cout))


def _bn_lrelu(y, sc, sh):
    """Per-sample full-T lane-dense BN + LeakyReLU pass (kt == 2 path)."""
    n, t, h, wcout = y.shape
    return pl.pallas_call(
        _bn_lrelu_kernel,
        grid=(n,),
        in_specs=[
            pl.BlockSpec((1, t, h, wcout), lambda i: (i, 0, 0, 0)),
            pl.BlockSpec((1, wcout), lambda i: (0, 0)),
            pl.BlockSpec((1, wcout), lambda i: (0, 0)),
        ],
        out_specs=pl.BlockSpec((1, t, h, wcout), lambda i: (i, 0, 0, 0)),
        out_shape=jax.ShapeDtypeStruct((n, t, h, wcout), jnp.float32),
        compiler_params=pltpu.CompilerParams(
            dimension_semantics=("parallel",),
            vmem_limit_bytes=VMEM_LIMIT),
    )(y, sc, sh)


def _residual_epilogue(y1, y2, sc1, sh1, sc2, sh2):
    """Fused BN+LReLU (both branches) + residual + ReplicationPad3d + concat."""
    n, t1, h, wcout = y1.shape
    t2 = y2.shape[1]                 # = kt - 1
    t_total = t1 + t2                # = T
    kern = functools.partial(_residual_epilogue_kernel, t1=t1, t2=t2)
    return pl.pallas_call(
        kern,
        grid=(n,),
        in_specs=[
            pl.BlockSpec((1, t1, h, wcout), lambda i: (i, 0, 0, 0)),
            pl.BlockSpec((1, t2, h, wcout), lambda i: (i, 0, 0, 0)),
            pl.BlockSpec((1, wcout), lambda i: (0, 0)),
            pl.BlockSpec((1, wcout), lambda i: (0, 0)),
            pl.BlockSpec((1, wcout), lambda i: (0, 0)),
            pl.BlockSpec((1, wcout), lambda i: (0, 0)),
        ],
        out_specs=pl.BlockSpec((1, t_total, h, wcout), lambda i: (i, 0, 0, 0)),
        out_shape=jax.ShapeDtypeStruct((n, t_total, h, wcout), jnp.float32),
        compiler_params=pltpu.CompilerParams(
            dimension_semantics=("parallel",),
            vmem_limit_bytes=VMEM_LIMIT),
    )(y1, y2, sc1, sh1, sc2, sh2)


def rnet_not_factorized_forward(x, params):
    """x: (N, C_in, T, H, W) NCDHW.  Returns (N, C_out, T, H, W), like PyTorch."""
    n, _, t, h, wdim = x.shape
    kt = params["w1"].shape[2]          # kernel_size[0] (temporal_kernel_value)
    kh = params["w1"].shape[3]          # kernel_size[1]
    sp = kh // 2                        # module pads H and W with kernel_size[1]//2

    if kt == 2:
        y, s, ss, (t2, h2, w2, cout) = conv3d_im2col(
            x, params["w2"], params["b2"], (0, 0))
        sc, sh = _bn_scale_shift(s, ss, n * t2 * h2 * w2, w2, cout,
                                 params["g2"], params["be2"])
        out = _bn_lrelu(y, sc, sh).reshape(n, t2, h2, w2, cout)
        return jnp.transpose(out, (0, 4, 1, 2, 3))

    # Residual path (kt > 2)
    y1, s1, ss1, (t1, h1, w1o, cout) = conv3d_im2col(
        x, params["w1"], params["b1"], (sp, sp))                  # (N,T-kt+1,H,W*C)
    sc1, sh1 = _bn_scale_shift(s1, ss1, n * t1 * h1 * w1o, w1o, cout,
                               params["g1"], params["be1"])

    x_tail = x[:, :, -kt:, :, :]
    y2, s2, ss2, (t2, h2, w2o, _) = conv3d_im2col(
        x_tail, params["w2"], params["b2"], (0, 0))               # (N,kt-1,H,W*C)
    sc2, sh2 = _bn_scale_shift(s2, ss2, n * t2 * h2 * w2o, w2o, cout,
                               params["g2"], params["be2"])

    # TODO(synk): conv -> stats -> epilogue could become one pallas_call with
    # y1/y2 resident in VMEM (saves their HBM round trip) if shapes grow.
    out_ld = _residual_epilogue(y1, y2, sc1, sh1, sc2, sh2)       # (N,T,H,W*C)
    out = out_ld.reshape(n, t, h1, w1o, cout)
    # TODO(synk): final NCDHW permute stays as one XLA transpose; emitting NCDHW
    # directly from the kernel would force narrow (W=16 lane) stores.
    return jnp.transpose(out, (0, 4, 1, 2, 3))


# --------------------------------------------------------------------------
# Pure-JAX reference (golden check for frame alignment / repl-pad / BN)
# --------------------------------------------------------------------------
def _reference_forward(x, params):
    def conv_bn_lrelu(inp, w, b, g, be, pad_hw):
        inp = inp.astype(MATMUL_DTYPE).astype(jnp.float32)   # same input rounding
        wq = w.astype(MATMUL_DTYPE).astype(jnp.float32)
        ph, pw = pad_hw
        y = jax.lax.conv_general_dilated(
            inp, wq, window_strides=(1, 1, 1),
            padding=((0, 0), (ph, ph), (pw, pw)),
            dimension_numbers=("NCDHW", "OIDHW", "NCDHW"),
            precision=jax.lax.Precision.HIGHEST)
        y = y + b.reshape(1, -1, 1, 1, 1).astype(jnp.float32)
        mean = jnp.mean(y, axis=(0, 2, 3, 4), keepdims=True)
        var = jnp.var(y, axis=(0, 2, 3, 4), keepdims=True)
        y = (y - mean) / jnp.sqrt(var + BN_EPS)
        y = y * g.reshape(1, -1, 1, 1, 1) + be.reshape(1, -1, 1, 1, 1)
        return jnp.where(y >= 0, y, NEG_SLOPE * y)

    kt = params["w1"].shape[2]
    kh = params["w1"].shape[3]
    sp = kh // 2
    if kt == 2:
        return conv_bn_lrelu(x, params["w2"], params["b2"],
                             params["g2"], params["be2"], (0, 0))
    a1 = conv_bn_lrelu(x, params["w1"], params["b1"],
                       params["g1"], params["be1"], (sp, sp))
    a2 = conv_bn_lrelu(x[:, :, -kt:], params["w2"], params["b2"],
                       params["g2"], params["be2"], (0, 0))
    a2 = jnp.concatenate([a2, a2[:, :, -1:]], axis=2)   # ReplicationPad3d depth+1
    return jnp.concatenate([a1[:, :, :-1], a1[:, :, -1:] - a2], axis=2)


if __name__ == "__main__":
    key = jax.random.PRNGKey(0)
    ks = jax.random.split(key, 9)

    in_channels, out_channels = 4, 8
    kernel_size = (3, 3, 3)              # temporal_kernel_value = 3 -> residual path
    batch, seq, height, width = 2, 8, 16, 16

    # nn.Conv3d weights: (out, in, kT, kH, kW); BatchNorm3d affine params: (out,)
    fan1 = in_channels * kernel_size[0] * kernel_size[1] * kernel_size[2]
    fan2 = in_channels * 2
    params = {
        "w1": jax.random.normal(ks[0], (out_channels, in_channels) + kernel_size,
                                jnp.float32) / jnp.sqrt(float(fan1)),
        "b1": 0.1 * jax.random.normal(ks[1], (out_channels,), jnp.float32),
        "g1": 1.0 + 0.1 * jax.random.normal(ks[2], (out_channels,), jnp.float32),
        "be1": 0.1 * jax.random.normal(ks[3], (out_channels,), jnp.float32),
        "w2": jax.random.normal(ks[4], (out_channels, in_channels, 2, 1, 1),
                                jnp.float32) / jnp.sqrt(float(fan2)),
        "b2": 0.1 * jax.random.normal(ks[5], (out_channels,), jnp.float32),
        "g2": 1.0 + 0.1 * jax.random.normal(ks[6], (out_channels,), jnp.float32),
        "be2": 0.1 * jax.random.normal(ks[7], (out_channels,), jnp.float32),
    }
    x = jax.random.normal(ks[8], (batch, in_channels, seq, height, width),
                          jnp.float32)

    fwd = jax.jit(rnet_not_factorized_forward)
    out = jax.block_until_ready(fwd(x, params))
    assert out.shape == (batch, out_channels, seq, height, width), out.shape
    assert bool(jnp.all(jnp.isfinite(out)))

    # Frame-by-frame golden check (residual / replication-pad alignment, BN stats).
    ref = jax.block_until_ready(jax.jit(_reference_forward)(x, params))
    max_err = float(jnp.max(jnp.abs(out - ref)))
    assert max_err < 2e-3, f"max |kernel - reference| = {max_err}"
    print("KERNEL_OK")
</pallas_src>

<mosaic_0001>
module attributes {stable_mosaic.version = 11 : i64} {
  func.func @_conv_stats_kernel(%arg0: memref<192x648xbf16, #tpu.memory_space<vmem>>, %arg1: memref<648x128xbf16, #tpu.memory_space<vmem>>, %arg2: memref<1x128xf32, #tpu.memory_space<vmem>>, %arg3: memref<192x128xf32, #tpu.memory_space<vmem>>, %arg4: memref<1x128xf32, #tpu.memory_space<vmem>>, %arg5: memref<1x128xf32, #tpu.memory_space<vmem>>) attributes {dimension_semantics = [], scalar_prefetch = 0 : i64, scratch_operands = 0 : i64, tpu.core_type = #tpu.core_type<tc>} {
    %c0 = arith.constant 0 : index
    %c0_0 = arith.constant 0 : index
    %0 = vector.load %arg0[%c0, %c0_0] : memref<192x648xbf16, #tpu.memory_space<vmem>>, vector<192x648xbf16>
    %c0_1 = arith.constant 0 : index
    %c0_2 = arith.constant 0 : index
    %1 = vector.load %arg1[%c0_1, %c0_2] : memref<648x128xbf16, #tpu.memory_space<vmem>>, vector<648x128xbf16>
    %cst = arith.constant dense<0.000000e+00> : vector<192x128xf32>
    %2 = tpu.matmul %0, %1, %cst {dimension_numbers = #tpu.dot_dimension_numbers<[1], [0], [0], [1], [0, 0, 1, 1], [], []>} : vector<192x648xbf16>, vector<648x128xbf16>, vector<192x128xf32> -> vector<192x128xf32>
    %c0_3 = arith.constant 0 : index
    %c0_4 = arith.constant 0 : index
    %3 = vector.load %arg2[%c0_3, %c0_4] : memref<1x128xf32, #tpu.memory_space<vmem>>, vector<1x128xf32>
    %4 = vector.broadcast %3 : vector<1x128xf32> to vector<192x128xf32>
    %5 = arith.addf %2, %4 : vector<192x128xf32>
    %c0_5 = arith.constant 0 : index
    %c0_6 = arith.constant 0 : index
    %6 = vector.load %arg3[%c0_5, %c0_6] : memref<192x128xf32, #tpu.memory_space<vmem>>, vector<192x128xf32>
    tpu.vector_store %arg3[%c0_5, %c0_6], %5 {strides = array<i32>} : memref<192x128xf32, #tpu.memory_space<vmem>>, vector<192x128xf32>,
    %cst_7 = arith.constant dense<0.000000e+00> : vector<128xf32>
    %7 = vector.multi_reduction <add>, %5, %cst_7 [0] : vector<192x128xf32> to vector<128xf32>
    %8 = vector.shape_cast %7 : vector<128xf32> to vector<1x128xf32>
    %c0_8 = arith.constant 0 : index
    %c0_9 = arith.constant 0 : index
    %9 = vector.load %arg4[%c0_8, %c0_9] : memref<1x128xf32, #tpu.memory_space<vmem>>, vector<1x128xf32>
    tpu.vector_store %arg4[%c0_8, %c0_9], %8 {strides = array<i32>} : memref<1x128xf32, #tpu.memory_space<vmem>>, vector<1x128xf32>,
    %10 = arith.mulf %5, %5 : vector<192x128xf32>
    %cst_10 = arith.constant dense<0.000000e+00> : vector<128xf32>
    %11 = vector.multi_reduction <add>, %10, %cst_10 [0] : vector<192x128xf32> to vector<128xf32>
    %12 = vector.shape_cast %11 : vector<128xf32> to vector<1x128xf32>
    %c0_11 = arith.constant 0 : index
    %c0_12 = arith.constant 0 : index
    %13 = vector.load %arg5[%c0_11, %c0_12] : memref<1x128xf32, #tpu.memory_space<vmem>>, vector<1x128xf32>
    tpu.vector_store %arg5[%c0_11, %c0_12], %12 {strides = array<i32>} : memref<1x128xf32, #tpu.memory_space<vmem>>, vector<1x128xf32>,
    return
  }
}

module attributes {stable_mosaic.version = 11 : i64} {
  func.func @_conv_stats_kernel(%arg0: memref<64x128xbf16, #tpu.memory_space<vmem>>, %arg1: memref<128x128xbf16, #tpu.memory_space<vmem>>, %arg2: memref<1x128xf32, #tpu.memory_space<vmem>>, %arg3: memref<64x128xf32, #tpu.memory_space<vmem>>, %arg4: memref<1x128xf32, #tpu.memory_space<vmem>>, %arg5: memref<1x128xf32, #tpu.memory_space<vmem>>) attributes {dimension_semantics = [], scalar_prefetch = 0 : i64, scratch_operands = 0 : i64, tpu.core_type = #tpu.core_type<tc>} {
    %c0 = arith.constant 0 : index
    %c0_0 = arith.constant 0 : index
    %0 = vector.load %arg0[%c0, %c0_0] : memref<64x128xbf16, #tpu.memory_space<vmem>>, vector<64x128xbf16>
    %c0_1 = arith.constant 0 : index
    %c0_2 = arith.constant 0 : index
    %1 = vector.load %arg1[%c0_1, %c0_2] : memref<128x128xbf16, #tpu.memory_space<vmem>>, vector<128x128xbf16>
    %cst = arith.constant dense<0.000000e+00> : vector<64x128xf32>
    %2 = tpu.matmul %0, %1, %cst {dimension_numbers = #tpu.dot_dimension_numbers<[1], [0], [0], [1], [0, 0, 1, 1], [], []>} : vector<64x128xbf16>, vector<128x128xbf16>, vector<64x128xf32> -> vector<64x128xf32>
    %c0_3 = arith.constant 0 : index
    %c0_4 = arith.constant 0 : index
    %3 = vector.load %arg2[%c0_3, %c0_4] : memref<1x128xf32, #tpu.memory_space<vmem>>, vector<1x128xf32>
    %4 = vector.broadcast %3 : vector<1x128xf32> to vector<64x128xf32>
    %5 = arith.addf %2, %4 : vector<64x128xf32>
    %c0_5 = arith.constant 0 : index
    %c0_6 = arith.constant 0 : index
    %6 = vector.load %arg3[%c0_5, %c0_6] : memref<64x128xf32, #tpu.memory_space<vmem>>, vector<64x128xf32>
    tpu.vector_store %arg3[%c0_5, %c0_6], %5 {strides = array<i32>} : memref<64x128xf32, #tpu.memory_space<vmem>>, vector<64x128xf32>,
    %cst_7 = arith.constant dense<0.000000e+00> : vector<128xf32>
    %7 = vector.multi_reduction <add>, %5, %cst_7 [0] : vector<64x128xf32> to vector<128xf32>
    %8 = vector.shape_cast %7 : vector<128xf32> to vector<1x128xf32>
    %c0_8 = arith.constant 0 : index
    %c0_9 = arith.constant 0 : index
    %9 = vector.load %arg4[%c0_8, %c0_9] : memref<1x128xf32, #tpu.memory_space<vmem>>, vector<1x128xf32>
    tpu.vector_store %arg4[%c0_8, %c0_9], %8 {strides = array<i32>} : memref<1x128xf32, #tpu.memory_space<vmem>>, vector<1x128xf32>,
    %10 = arith.mulf %5, %5 : vector<64x128xf32>
    %cst_10 = arith.constant dense<0.000000e+00> : vector<128xf32>
    %11 = vector.multi_reduction <add>, %10, %cst_10 [0] : vector<64x128xf32> to vector<128xf32>
    %12 = vector.shape_cast %11 : vector<128xf32> to vector<1x128xf32>
    %c0_11 = arith.constant 0 : index
    %c0_12 = arith.constant 0 : index
    %13 = vector.load %arg5[%c0_11, %c0_12] : memref<1x128xf32, #tpu.memory_space<vmem>>, vector<1x128xf32>
    tpu.vector_store %arg5[%c0_11, %c0_12], %12 {strides = array<i32>} : memref<1x128xf32, #tpu.memory_space<vmem>>, vector<1x128xf32>,
    return
  }
}

module attributes {stable_mosaic.version = 11 : i64} {
  func.func @_residual_epilogue_kernel(%arg0: i32, %arg1: memref<1x6x16x128xf32, #tpu.memory_space<vmem>>, %arg2: memref<1x2x16x128xf32, #tpu.memory_space<vmem>>, %arg3: memref<1x128xf32, #tpu.memory_space<vmem>>, %arg4: memref<1x128xf32, #tpu.memory_space<vmem>>, %arg5: memref<1x128xf32, #tpu.memory_space<vmem>>, %arg6: memref<1x128xf32, #tpu.memory_space<vmem>>, %arg7: memref<1x8x16x128xf32, #tpu.memory_space<vmem>>) attributes {dimension_semantics = [#tpu.dimension_semantics<parallel>], iteration_bounds = array<i64: 2>, scalar_prefetch = 0 : i64, scratch_operands = 0 : i64, tpu.core_type = #tpu.core_type<tc>, window_params = [{transform_indices = @transform_0, window_bounds = array<i64: 1, 6, 16, 128>}, {transform_indices = @transform_1, window_bounds = array<i64: 1, 2, 16, 128>}, {pipeline_mode = #tpu.pipeline_mode<synchronous>, transform_indices = @transform_2, window_bounds = array<i64: 1, 128>}, {pipeline_mode = #tpu.pipeline_mode<synchronous>, transform_indices = @transform_3, window_bounds = array<i64: 1, 128>}, {pipeline_mode = #tpu.pipeline_mode<synchronous>, transform_indices = @transform_4, window_bounds = array<i64: 1, 128>}, {pipeline_mode = #tpu.pipeline_mode<synchronous>, transform_indices = @transform_5, window_bounds = array<i64: 1, 128>}, {transform_indices = @transform_6, window_bounds = array<i64: 1, 8, 16, 128>}]} {
    %c0 = arith.constant 0 : index
    %c0_0 = arith.constant 0 : index
    %c0_1 = arith.constant 0 : index
    %c0_2 = arith.constant 0 : index
    %0 = vector.load %arg1[%c0, %c0_0, %c0_1, %c0_2] : memref<1x6x16x128xf32, #tpu.memory_space<vmem>>, vector<1x6x16x128xf32>
    %c0_3 = arith.constant 0 : index
    %c0_4 = arith.constant 0 : index
    %1 = vector.load %arg3[%c0_3, %c0_4] : memref<1x128xf32, #tpu.memory_space<vmem>>, vector<1x128xf32>
    %2 = vector.shape_cast %1 : vector<1x128xf32> to vector<1x1x1x128xf32>
    %3 = vector.broadcast %2 : vector<1x1x1x128xf32> to vector<1x6x16x128xf32>
    %4 = arith.mulf %0, %3 : vector<1x6x16x128xf32>
    %c0_5 = arith.constant 0 : index
    %c0_6 = arith.constant 0 : index
    %5 = vector.load %arg4[%c0_5, %c0_6] : memref<1x128xf32, #tpu.memory_space<vmem>>, vector<1x128xf32>
    %6 = vector.shape_cast %5 : vector<1x128xf32> to vector<1x1x1x128xf32>
    %7 = vector.broadcast %6 : vector<1x1x1x128xf32> to vector<1x6x16x128xf32>
    %8 = arith.addf %4, %7 : vector<1x6x16x128xf32>
    %cst = arith.constant 0.000000e+00 : f32
    %9 = vector.broadcast %cst : f32 to vector<1x6x16x128xf32>
    %10 = arith.cmpf oge, %8, %9 : vector<1x6x16x128xf32>
    %cst_7 = arith.constant 0.00999999977 : f32
    %11 = vector.broadcast %cst_7 : f32 to vector<1x6x16x128xf32>
    %12 = arith.mulf %11, %8 : vector<1x6x16x128xf32>
    %13 = arith.select %10, %8, %12 : vector<1x6x16x128xi1>, vector<1x6x16x128xf32>
    %c0_8 = arith.constant 0 : index
    %c0_9 = arith.constant 0 : index
    %c0_10 = arith.constant 0 : index
    %c0_11 = arith.constant 0 : index
    %14 = vector.load %arg2[%c0_8, %c0_9, %c0_10, %c0_11] : memref<1x2x16x128xf32, #tpu.memory_space<vmem>>, vector<1x2x16x128xf32>
    %c0_12 = arith.constant 0 : index
    %c0_13 = arith.constant 0 : index
    %15 = vector.load %arg5[%c0_12, %c0_13] : memref<1x128xf32, #tpu.memory_space<vmem>>, vector<1x128xf32>
    %16 = vector.shape_cast %15 : vector<1x128xf32> to vector<1x1x1x128xf32>
    %17 = vector.broadcast %16 : vector<1x1x1x128xf32> to vector<1x2x16x128xf32>
    %18 = arith.mulf %14, %17 : vector<1x2x16x128xf32>
    %c0_14 = arith.constant 0 : index
    %c0_15 = arith.constant 0 : index
    %19 = vector.load %arg6[%c0_14, %c0_15] : memref<1x128xf32, #tpu.memory_space<vmem>>, vector<1x128xf32>
    %20 = vector.shape_cast %19 : vector<1x128xf32> to vector<1x1x1x128xf32>
    %21 = vector.broadcast %20 : vector<1x1x1x128xf32> to vector<1x2x16x128xf32>
    %22 = arith.addf %18, %21 : vector<1x2x16x128xf32>
    %cst_16 = arith.constant 0.000000e+00 : f32
    %23 = vector.broadcast %cst_16 : f32 to vector<1x2x16x128xf32>
    %24 = arith.cmpf oge, %22, %23 : vector<1x2x16x128xf32>
    %cst_17 = arith.constant 0.00999999977 : f32
    %25 = vector.broadcast %cst_17 : f32 to vector<1x2x16x128xf32>
    %26 = arith.mulf %25, %22 : vector<1x2x16x128xf32>
    %27 = arith.select %24, %22, %26 : vector<1x2x16x128xi1>, vector<1x2x16x128xf32>
    %28 = vector.extract_strided_slice %13 {offsets = [0, 0, 0, 0], sizes = [1, 5, 16, 128], strides = [1, 1, 1, 1]} : vector<1x6x16x128xf32> to vector<1x5x16x128xf32>
    %c0_18 = arith.constant 0 : index
    %c0_19 = arith.constant 0 : index
    %c0_20 = arith.constant 0 : index
    %c0_21 = arith.constant 0 : index
    %29 = vector.load %arg7[%c0_18, %c0_19, %c0_20, %c0_21] : memref<1x8x16x128xf32, #tpu.memory_space<vmem>>, vector<1x5x16x128xf32>
    tpu.vector_store %arg7[%c0_18, %c0_19, %c0_20, %c0_21], %28 {strides = array<i32>} : memref<1x8x16x128xf32, #tpu.memory_space<vmem>>, vector<1x5x16x128xf32>,
    %30 = vector.extract_strided_slice %13 {offsets = [0, 5, 0, 0], sizes = [1, 1, 16, 128], strides = [1, 1, 1, 1]} : vector<1x6x16x128xf32> to vector<1x1x16x128xf32>
    %31 = vector.broadcast %30 : vector<1x1x16x128xf32> to vector<1x2x16x128xf32>
    %32 = arith.subf %31, %27 : vector<1x2x16x128xf32>
    %c0_22 = arith.constant 0 : index
    %c5 = arith.constant 5 : index
    %c0_23 = arith.constant 0 : index
    %c0_24 = arith.constant 0 : index
    %33 = vector.load %arg7[%c0_22, %c5, %c0_23, %c0_24] : memref<1x8x16x128xf32, #tpu.memory_space<vmem>>, vector<1x2x16x128xf32>
    tpu.vector_store %arg7[%c0_22, %c5, %c0_23, %c0_24], %32 {strides = array<i32>} : memref<1x8x16x128xf32, #tpu.memory_space<vmem>>, vector<1x2x16x128xf32>,
    %34 = vector.extract_strided_slice %27 {offsets = [0, 1, 0, 0], sizes = [1, 1, 16, 128], strides = [1, 1, 1, 1]} : vector<1x2x16x128xf32> to vector<1x1x16x128xf32>
    %35 = arith.subf %30, %34 : vector<1x1x16x128xf32>
    %c0_25 = arith.constant 0 : index
    %c7 = arith.constant 7 : index
    %c0_26 = arith.constant 0 : index
    %c0_27 = arith.constant 0 : index
    %36 = vector.load %arg7[%c0_25, %c7, %c0_26, %c0_27] : memref<1x8x16x128xf32, #tpu.memory_space<vmem>>, vector<1x1x16x128xf32>
    tpu.vector_store %arg7[%c0_25, %c7, %c0_26, %c0_27], %35 {strides = array<i32>} : memref<1x8x16x128xf32, #tpu.memory_space<vmem>>, vector<1x1x16x128xf32>,
    return
  }
  func.func @transform_0(%arg0: i32) -> (i32, i32, i32, i32) {
    %c0_i32 = arith.constant 0 : i32
    %c0_i32_0 = arith.constant 0 : i32
    %c0_i32_1 = arith.constant 0 : i32
    %c0_i32_2 = arith.constant 0 : i32
    return %arg0, %c0_i32, %c0_i32_0, %c0_i32_1 : i32, i32, i32, i32
  }
  func.func @transform_1(%arg0: i32) -> (i32, i32, i32, i32) {
    %c0_i32 = arith.constant 0 : i32
    %c0_i32_0 = arith.constant 0 : i32
    %c0_i32_1 = arith.constant 0 : i32
    %c0_i32_2 = arith.constant 0 : i32
    return %arg0, %c0_i32, %c0_i32_0, %c0_i32_1 : i32, i32, i32, i32
  }
  func.func @transform_2(%arg0: i32) -> (i32, i32) {
    %c0_i32 = arith.constant 0 : i32
    %c0_i32_0 = arith.constant 0 : i32
    %c0_i32_1 = arith.constant 0 : i32
    return %c0_i32, %c0_i32_0 : i32, i32
  }
  func.func @transform_3(%arg0: i32) -> (i32, i32) {
    %c0_i32 = arith.constant 0 : i32
    %c0_i32_0 = arith.constant 0 : i32
    %c0_i32_1 = arith.constant 0 : i32
    return %c0_i32, %c0_i32_0 : i32, i32
  }
  func.func @transform_4(%arg0: i32) -> (i32, i32) {
    %c0_i32 = arith.constant 0 : i32
    %c0_i32_0 = arith.constant 0 : i32
    %c0_i32_1 = arith.constant 0 : i32
    return %c0_i32, %c0_i32_0 : i32, i32
  }
  func.func @transform_5(%arg0: i32) -> (i32, i32) {
    %c0_i32 = arith.constant 0 : i32
    %c0_i32_0 = arith.constant 0 : i32
    %c0_i32_1 = arith.constant 0 : i32
    return %c0_i32, %c0_i32_0 : i32, i32
  }
  func.func @transform_6(%arg0: i32) -> (i32, i32, i32, i32) {
    %c0_i32 = arith.constant 0 : i32
    %c0_i32_0 = arith.constant 0 : i32
    %c0_i32_1 = arith.constant 0 : i32
    %c0_i32_2 = arith.constant 0 : i32
    return %arg0, %c0_i32, %c0_i32_0, %c0_i32_1 : i32, i32, i32, i32
  }
}

</mosaic_0001>

<llo_original>
// kernel: tile.33
$region0: #{tile.33}
  #allocation0 [shape = 's32[1]{0}', space=sflag, size = 0x4, scoped, tag = 'scoped memory for tile.33']
  %s0 = inlined_call_operand.vmem [shape: f32[8], index: 0, kind: input, shape index: {}]
  %s1 = inlined_call_operand.vmem [shape: f32[16,8], index: 1, kind: output, shape index: {}]
  // Predicated region
  $region2: #{tile.33} parent=0 // pred_check
    _
  $region3: #{tile.33} parent=0 // pred_check_branch
    %3 = sbr.rel (0) target = $region5
  $region4: #{tile.33} parent=0 // pred_region
    _
  $region5: #{tile.33} parent=0 // pred_fallthru
    _
  %v4 = vld [vmem:[%s0] ss:$0 sm:$0xff]
  %5 = vst [vmem:[%s1] sm:$0xff] %v4
  %s6 = scalar_lea.vmem %s1, 8
  %7 = vst [vmem:[%s6] sm:$0xff] %v4

// kernel: tile.34
$region0: #{tile.34}
  %s0 = inlined_call_operand.vmem [shape: f32[16,8], index: 0, kind: input, shape index: {}]
  %s1 = inlined_call_operand.vmem [shape: f32[1,128], index: 1, kind: output, shape index: {}]
  $region1: #{tile.34} parent=0
    #allocation0 [shape = 'u8[4096]{0}', space=vmem, size = 0x1000, scoped, tag = 'scoped mem for output reshape']
    %v2 = vld [vmem:[%s0] sm:$0x1]
    %vm3 = vcmask 64512
    %4 = vst.msk [vmem:[#allocation0] sm:$0x1] %vm3, %v2
    %s5 = scalar_lea.vmem %s0, 15
    %v6 = vld [vmem:[%s5] sm:$0x1]
    %7 = vrot.lane.b32.xlu0 %v6, 120
    %v8 = vpop.permute.xlu0 %7
    %vm9 = vcmask 1048512
    %10 = vst.msk [vmem:[#allocation0] sm:$0x1] %vm9, %v8
    %s11 = scalar_lea.vmem %s0, 14
    %v12 = vld [vmem:[%s11] sm:$0x1]
    %13 = vrot.lane.b32.xlu0 %v12, 112
    %v14 = vpop.permute.xlu0 %13
    %vm15 = vcmask 982912
    %16 = vst.msk [vmem:[#allocation0] sm:$0x1] %vm15, %v14
    %s17 = scalar_lea.vmem %s0, 13
    %v18 = vld [vmem:[%s17] sm:$0x1]
    %19 = vrot.lane.b32.xlu0 %v18, 104
    %v20 = vpop.permute.xlu0 %19
    %vm21 = vcmask 917312
    %22 = vst.msk [vmem:[#allocation0] sm:$0x1] %vm21, %v20
    %s23 = scalar_lea.vmem %s0, 12
    %v24 = vld [vmem:[%s23] sm:$0x1]
    %25 = vrot.lane.b32.xlu0 %v24, 96
    %v26 = vpop.permute.xlu0 %25
    %vm27 = vcmask 851712
    %28 = vst.msk [vmem:[#allocation0] sm:$0x1] %vm27, %v26
    %s29 = scalar_lea.vmem %s0, 11
    %v30 = vld [vmem:[%s29] sm:$0x1]
    %31 = vrot.lane.b32.xlu0 %v30, 88
    %v32 = vpop.permute.xlu0 %31
    %vm33 = vcmask 786112
    %34 = vst.msk [vmem:[#allocation0] sm:$0x1] %vm33, %v32
    %s35 = scalar_lea.vmem %s0, 10
    %v36 = vld [vmem:[%s35] sm:$0x1]
    %37 = vrot.lane.b32.xlu0 %v36, 80
    %v38 = vpop.permute.xlu0 %37
    %vm39 = vcmask 720512
    %40 = vst.msk [vmem:[#allocation0] sm:$0x1] %vm39, %v38
    %s41 = scalar_lea.vmem %s0, 9
    %v42 = vld [vmem:[%s41] sm:$0x1]
    %43 = vrot.lane.b32.xlu0 %v42, 72
    %v44 = vpop.permute.xlu0 %43
    %vm45 = vcmask 654912
    %46 = vst.msk [vmem:[#allocation0] sm:$0x1] %vm45, %v44
    %s47 = scalar_lea.vmem %s0, 8
    %v48 = vld [vmem:[%s47] sm:$0x1]
    %49 = vrot.lane.b32.xlu0 %v48, 64
    %v50 = vpop.permute.xlu0 %49
    %vm51 = vcmask 589312
    %52 = vst.msk [vmem:[#allocation0] sm:$0x1] %vm51, %v50
    %s53 = scalar_lea.vmem %s0, 7
    %v54 = vld [vmem:[%s53] sm:$0x1]
    %55 = vrot.lane.b32.xlu0 %v54, 56
    %v56 = vpop.permute.xlu0 %55
    %vm57 = vcmask 523712
    %58 = vst.msk [vmem:[#allocation0] sm:$0x1] %vm57, %v56
    %s59 = scalar_lea.vmem %s0, 6
    %v60 = vld [vmem:[%s59] sm:$0x1]
    %61 = vrot.lane.b32.xlu0 %v60, 48
    %v62 = vpop.permute.xlu0 %61
    %vm63 = vcmask 458112
    %64 = vst.msk [vmem:[#allocation0] sm:$0x1] %vm63, %v62
    %s65 = scalar_lea.vmem %s0, 5
    %v66 = vld [vmem:[%s65] sm:$0x1]
    %67 = vrot.lane.b32.xlu0 %v66, 40
    %v68 = vpop.permute.xlu0 %67
    %vm69 = vcmask 392512
    %70 = vst.msk [vmem:[#allocation0] sm:$0x1] %vm69, %v68
    %s71 = scalar_lea.vmem %s0, 4
    %v72 = vld [vmem:[%s71] sm:$0x1]
    %73 = vrot.lane.b32.xlu0 %v72, 32
    %v74 = vpop.permute.xlu0 %73
    %vm75 = vcmask 326912
    %76 = vst.msk [vmem:[#allocation0] sm:$0x1] %vm75, %v74
    %s77 = scalar_lea.vmem %s0, 3
    %v78 = vld [vmem:[%s77] sm:$0x1]
    %79 = vrot.lane.b32.xlu0 %v78, 24
    %v80 = vpop.permute.xlu0 %79
    %vm81 = vcmask 261312
    %82 = vst.msk [vmem:[#allocation0] sm:$0x1] %vm81, %v80
    %s83 = scalar_lea.vmem %s0, 2
    %v84 = vld [vmem:[%s83] sm:$0x1]
    %85 = vrot.lane.b32.xlu0 %v84, 16
    %v86 = vpop.permute.xlu0 %85
    %vm87 = vcmask 195712
    %88 = vst.msk [vmem:[#allocation0] sm:$0x1] %vm87, %v86
    %s89 = scalar_lea.vmem %s0, 1
    %v90 = vld [vmem:[%s89] sm:$0x1]
    %91 = vrot.lane.b32.xlu0 %v90, 8
    %v92 = vpop.permute.xlu0 %91
    %vm93 = vcmask 130112
    %94 = vst.msk [vmem:[#allocation0] sm:$0x1] %vm93, %v92
    %s96 = sshllo.u32 0, 1
    %v98 = vld [vmem:[#allocation0] sm:%s96]
    %s99 = sshllo.u32 0, 1
    %100 = vst [vmem:[%s1] sm:%s99] %v98

// kernel: rnet_not_factorized_forward.3
$region0: #{rnet_not_factorized_forward.3}
  #allocation0 [shape = 'u32[]', space=smem, size = 0x4, offset = 0x4, fixed_abs, tag = 'smem constant byte address 0x4 - core index']
  #allocation1 [shape = 'u32[144,128]{1,0:T(1,128)}', space=vmem, size = 0x12000, scoped, tag = 'internal scratch']
  %s0 = inlined_call_operand.vmem [shape: bf16[192,648], index: 0, kind: input, shape index: {}]
  %s1 = inlined_call_operand.vmem [shape: bf16[648,128], index: 1, kind: input, shape index: {}]
  %s2 = inlined_call_operand.vmem [shape: f32[1,128], index: 2, kind: input, shape index: {}]
  %s3 = inlined_call_operand.vmem [shape: f32[192,128], index: 3, kind: output, shape index: {0}]
  %s4 = inlined_call_operand.vmem [shape: f32[1,128], index: 4, kind: output, shape index: {1}]
  %s5 = inlined_call_operand.vmem [shape: f32[1,128], index: 5, kind: output, shape index: {2}]
  %6 = xla_tuple %s3, %s4, %s5
  %s7 = sld [smem:[#allocation0]]
  $region38: #{rnet_not_factorized_forward.3} parent=0
    _
  %s9 = ssub.s32 1, %s7
  %s10 = scalar_select 0, %s9, %s7
  // Predicated region
  $region2: #{rnet_not_factorized_forward.3} parent=0 // pred_check
    _
  $region3: #{rnet_not_factorized_forward.3} parent=0 // pred_check_branch
    %12 = sbr.rel (0) target = $region5
  $region4: #{rnet_not_factorized_forward.3} parent=0 // pred_region
    _
  $region5: #{rnet_not_factorized_forward.3} parent=0 // pred_fallthru
    _
  // Predicated region
  $region6: #{rnet_not_factorized_forward.3} parent=0 // pred_check
    _
  $region7: #{rnet_not_factorized_forward.3} parent=0 // pred_check_branch
    %14 = sbr.rel (0) target = $region9
  $region8: #{rnet_not_factorized_forward.3} parent=0 // pred_region
    _
  $region9: #{rnet_not_factorized_forward.3} parent=0 // pred_fallthru
    _
  // Predicated region
  $region10: #{rnet_not_factorized_forward.3} parent=0 // pred_check
    _
  $region11: #{rnet_not_factorized_forward.3} parent=0 // pred_check_branch
    %16 = sbr.rel (0) target = $region13
  $region12: #{rnet_not_factorized_forward.3} parent=0 // pred_region
    _
  $region13: #{rnet_not_factorized_forward.3} parent=0 // pred_fallthru
    _
  %v18 = vld [vmem:[%s0] sm:$0xff]
  %v19 = vld [vmem:[%s0 + $0x8] sm:$0xff]
  %v20 = vld [vmem:[%s0 + $0x10] sm:$0xff]
  %v21 = vld [vmem:[%s0 + $0x18] sm:$0xff]
  %v22 = vld [vmem:[%s0 + $0x20] sm:$0xff]
  %v23 = vld [vmem:[%s0 + $0x28] sm:$0xff]
  %v24 = vld [vmem:[%s0 + $0x30] sm:$0xff]
  %v25 = vld [vmem:[%s0 + $0x38] sm:$0xff]
  %v26 = vld [vmem:[%s0 + $0x40] sm:$0xff]
  %v27 = vld [vmem:[%s0 + $0x48] sm:$0xff]
  %v28 = vld [vmem:[%s0 + $0x50] sm:$0xff]
  %v29 = vld [vmem:[%s0 + $0x58] sm:$0xff]
  %v30 = vld [vmem:[%s0 + $0x60] sm:$0xff]
  %v31 = vld [vmem:[%s0 + $0x68] sm:$0xff]
  %v32 = vld [vmem:[%s0 + $0x70] sm:$0xff]
  %v33 = vld [vmem:[%s0 + $0x78] sm:$0xff]
  %v34 = vld [vmem:[%s0 + $0x80] sm:$0xff]
  %v35 = vld [vmem:[%s0 + $0x88] sm:$0xff]
  %v36 = vld [vmem:[%s0 + $0x90] sm:$0xff]
  %v37 = vld [vmem:[%s0 + $0x98] sm:$0xff]
  %v38 = vld [vmem:[%s0 + $0xa0] sm:$0xff]
  %v39 = vld [vmem:[%s0 + $0xa8] sm:$0xff]
  %v40 = vld [vmem:[%s0 + $0xb0] sm:$0xff]
  %v41 = vld [vmem:[%s0 + $0xb8] sm:$0xff]
  %v42 = vld [vmem:[%s0 + $0xc0] sm:$0xff]
  %v43 = vld [vmem:[%s0 + $0xc8] sm:$0xff]
  %v44 = vld [vmem:[%s0 + $0xd0] sm:$0xff]
  %v45 = vld [vmem:[%s0 + $0xd8] sm:$0xff]
  %v46 = vld [vmem:[%s0 + $0xe0] sm:$0xff]
  %v47 = vld [vmem:[%s0 + $0xe8] sm:$0xff]
  %v48 = vld [vmem:[%s0 + $0xf0] sm:$0xff]
  %v49 = vld [vmem:[%s0 + $0xf8] sm:$0xff]
  %v50 = vld [vmem:[%s0 + $0x100] sm:$0xff]
  %v51 = vld [vmem:[%s0 + $0x108] sm:$0xff]
  %v52 = vld [vmem:[%s0 + $0x110] sm:$0xff]
  %v53 = vld [vmem:[%s0 + $0x118] sm:$0xff]
  %v54 = vld [vmem:[%s0 + $0x120] sm:$0xff]
  %v55 = vld [vmem:[%s0 + $0x128] sm:$0xff]
  %v56 = vld [vmem:[%s0 + $0x130] sm:$0xff]
  %v57 = vld [vmem:[%s0 + $0x138] sm:$0xff]
  %v58 = vld [vmem:[%s0 + $0x140] sm:$0xff]
  %v59 = vld [vmem:[%s0 + $0x148] sm:$0xff]
  %v60 = vld [vmem:[%s0 + $0x150] sm:$0xff]
  %v61 = vld [vmem:[%s0 + $0x158] sm:$0xff]
  %v62 = vld [vmem:[%s0 + $0x160] sm:$0xff]
  %v63 = vld [vmem:[%s0 + $0x168] sm:$0xff]
  %v64 = vld [vmem:[%s0 + $0x170] sm:$0xff]
  %v65 = vld [vmem:[%s0 + $0x178] sm:$0xff]
  %v66 = vld [vmem:[%s0 + $0x180] sm:$0xff]
  %v67 = vld [vmem:[%s0 + $0x188] sm:$0xff]
  %v68 = vld [vmem:[%s0 + $0x190] sm:$0xff]
  %v69 = vld [vmem:[%s0 + $0x198] sm:$0xff]
  %v70 = vld [vmem:[%s0 + $0x1a0] sm:$0xff]
  %v71 = vld [vmem:[%s0 + $0x1a8] sm:$0xff]
  %v72 = vld [vmem:[%s0 + $0x1b0] sm:$0xff]
  %v73 = vld [vmem:[%s0 + $0x1b8] sm:$0xff]
  %v74 = vld [vmem:[%s0 + $0x1c0] sm:$0xff]
  %v75 = vld [vmem:[%s0 + $0x1c8] sm:$0xff]
  %v76 = vld [vmem:[%s0 + $0x1d0] sm:$0xff]
  %v77 = vld [vmem:[%s0 + $0x1d8] sm:$0xff]
  %v78 = vld [vmem:[%s0 + $0x1e0] sm:$0xff]
  %v79 = vld [vmem:[%s0 + $0x1e8] sm:$0xff]
  %v80 = vld [vmem:[%s0 + $0x1f0] sm:$0xff]
  %v81 = vld [vmem:[%s0 + $0x1f8] sm:$0xff]
  %v82 = vld [vmem:[%s0 + $0x200] sm:$0xff]
  %v83 = vld [vmem:[%s0 + $0x208] sm:$0xff]
  %v84 = vld [vmem:[%s0 + $0x210] sm:$0xff]
  %v85 = vld [vmem:[%s0 + $0x218] sm:$0xff]
  %v86 = vld [vmem:[%s0 + $0x220] sm:$0xff]
  %v87 = vld [vmem:[%s0 + $0x228] sm:$0xff]
  %v88 = vld [vmem:[%s0 + $0x230] sm:$0xff]
  %v89 = vld [vmem:[%s0 + $0x238] sm:$0xff]
  %v90 = vld [vmem:[%s1] sm:$0xf]
  %v91 = vld [vmem:[%s1 + $0x4] sm:$0xf]
  %v92 = vld [vmem:[%s1 + $0x8] sm:$0xf]
  %v93 = vld [vmem:[%s1 + $0xc] sm:$0xf]
  %v94 = vld [vmem:[%s1 + $0x10] sm:$0xf]
  %v95 = vld [vmem:[%s1 + $0x14] sm:$0xf]
  %v96 = vld [vmem:[%s1 + $0x18] sm:$0xf]
  %v97 = vld [vmem:[%s1 + $0x1c] sm:$0xf]
  %v98 = vld [vmem:[%s1 + $0x20] sm:$0xf]
  %v99 = vld [vmem:[%s1 + $0x24] sm:$0xf]
  %v100 = vld [vmem:[%s1 + $0x28] sm:$0xf]
  %v101 = vld [vmem:[%s1 + $0x2c] sm:$0xf]
  %v102 = vld [vmem:[%s1 + $0x30] sm:$0xf]
  %v103 = vld [vmem:[%s1 + $0x34] sm:$0xf]
  %v104 = vld [vmem:[%s1 + $0x38] sm:$0xf]
  %v105 = vld [vmem:[%s1 + $0x3c] sm:$0xf]
  %v106 = vld [vmem:[%s1 + $0x40] sm:$0xf]
  %v107 = vld [vmem:[%s1 + $0x44] sm:$0xf]
  %v108 = vld [vmem:[%s1 + $0x48] sm:$0xf]
  %v109 = vld [vmem:[%s1 + $0x4c] sm:$0xf]
  %v110 = vld [vmem:[%s1 + $0x50] sm:$0xf]
  %v111 = vld [vmem:[%s1 + $0x54] sm:$0xf]
  %v112 = vld [vmem:[%s1 + $0x58] sm:$0xf]
  %v113 = vld [vmem:[%s1 + $0x5c] sm:$0xf]
  %v114 = vld [vmem:[%s1 + $0x60] sm:$0xf]
  %v115 = vld [vmem:[%s1 + $0x64] sm:$0xf]
  %v116 = vld [vmem:[%s1 + $0x68] sm:$0xf]
  %v117 = vld [vmem:[%s1 + $0x6c] sm:$0xf]
  %v118 = vld [vmem:[%s1 + $0x70] sm:$0xf]
  %v119 = vld [vmem:[%s1 + $0x74] sm:$0xf]
  %v120 = vld [vmem:[%s1 + $0x78] sm:$0xf]
  %v121 = vld [vmem:[%s1 + $0x7c] sm:$0xf]
  %v122 = vld [vmem:[%s1 + $0x80] sm:$0xf]
  %v123 = vld [vmem:[%s1 + $0x84] sm:$0xf]
  %v124 = vld [vmem:[%s1 + $0x88] sm:$0xf]
  %v125 = vld [vmem:[%s1 + $0x8c] sm:$0xf]
  %v126 = vld [vmem:[%s1 + $0x90] sm:$0xf]
  %v127 = vld [vmem:[%s1 + $0x94] sm:$0xf]
  %v128 = vld [vmem:[%s1 + $0x98] sm:$0xf]
  %v129 = vld [vmem:[%s1 + $0x9c] sm:$0xf]
  %v130 = vld [vmem:[%s1 + $0xa0] sm:$0xf]
  %v131 = vld [vmem:[%s1 + $0xa4] sm:$0xf]
  %v132 = vld [vmem:[%s1 + $0xa8] sm:$0xf]
  %v133 = vld [vmem:[%s1 + $0xac] sm:$0xf]
  %v134 = vld [vmem:[%s1 + $0xb0] sm:$0xf]
  %v135 = vld [vmem:[%s1 + $0xb4] sm:$0xf]
  %v136 = vld [vmem:[%s1 + $0xb8] sm:$0xf]
  %v137 = vld [vmem:[%s1 + $0xbc] sm:$0xf]
  %v138 = vld [vmem:[%s1 + $0xc0] sm:$0xf]
  %v139 = vld [vmem:[%s1 + $0xc4] sm:$0xf]
  %v140 = vld [vmem:[%s1 + $0xc8] sm:$0xf]
  %v141 = vld [vmem:[%s1 + $0xcc] sm:$0xf]
  %v142 = vld [vmem:[%s1 + $0xd0] sm:$0xf]
  %v143 = vld [vmem:[%s1 + $0xd4] sm:$0xf]
  %v144 = vld [vmem:[%s1 + $0xd8] sm:$0xf]
  %v145 = vld [vmem:[%s1 + $0xdc] sm:$0xf]
  %v146 = vld [vmem:[%s1 + $0xe0] sm:$0xf]
  %v147 = vld [vmem:[%s1 + $0xe4] sm:$0xf]
  %v148 = vld [vmem:[%s1 + $0xe8] sm:$0xf]
  %v149 = vld [vmem:[%s1 + $0xec] sm:$0xf]
  %v150 = vld [vmem:[%s1 + $0xf0] sm:$0xf]
  %v151 = vld [vmem:[%s1 + $0xf4] sm:$0xf]
  %v152 = vld [vmem:[%s1 + $0xf8] sm:$0xf]
  %v153 = vld [vmem:[%s1 + $0xfc] sm:$0xf]
  %v154 = vld [vmem:[%s1 + $0x100] sm:$0xf]
  %v155 = vld [vmem:[%s1 + $0x104] sm:$0xf]
  %v156 = vld [vmem:[%s1 + $0x108] sm:$0xf]
  %v157 = vld [vmem:[%s1 + $0x10c] sm:$0xf]
  %v158 = vld [vmem:[%s1 + $0x110] sm:$0xf]
  %v159 = vld [vmem:[%s1 + $0x114] sm:$0xf]
  %v160 = vld [vmem:[%s1 + $0x118] sm:$0xf]
  %v161 = vld [vmem:[%s1 + $0x11c] sm:$0xf]
  %v162 = vld [vmem:[%s1 + $0x120] sm:$0xf]
  %v163 = vld [vmem:[%s1 + $0x124] sm:$0xf]
  %v164 = vld [vmem:[%s1 + $0x128] sm:$0xf]
  %v165 = vld [vmem:[%s1 + $0x12c] sm:$0xf]
  %v166 = vld [vmem:[%s1 + $0x130] sm:$0xf]
  %v167 = vld [vmem:[%s1 + $0x134] sm:$0xf]
  %v168 = vld [vmem:[%s1 + $0x138] sm:$0xf]
  %v169 = vld [vmem:[%s1 + $0x13c] sm:$0xf]
  %v170 = vld [vmem:[%s1 + $0x140] sm:$0xf]
  %v171 = vld [vmem:[%s2] sm:$0x1]
  %v173 = vlaneseq
  %v174 = vshrl.u32 %v173, 7
  %v175 = vsub.s32 0, %v174
  %v176 = vrot.slane %v171, %v175
  %v250 = vunpack.c.l.b16 %v18
  %v251 = vunpack.c.h.b16 %v18
  %v252 = vunpack.c.l.b16 %v19
  %v253 = vunpack.c.h.b16 %v19
  %v254 = vunpack.c.l.b16 %v20
  %v255 = vunpack.c.h.b16 %v20
  %v256 = vunpack.c.l.b16 %v21
  %v257 = vunpack.c.h.b16 %v21
  %v258 = vunpack.c.l.b16 %v22
  %v259 = vunpack.c.h.b16 %v22
  %v260 = vunpack.c.l.b16 %v23
  %v261 = vunpack.c.h.b16 %v23
  %v262 = vunpack.c.l.b16 %v24
  %v263 = vunpack.c.h.b16 %v24
  %v264 = vunpack.c.l.b16 %v25
  %v265 = vunpack.c.h.b16 %v25
  %v266 = vunpack.c.l.b16 %v26
  %v267 = vunpack.c.h.b16 %v26
  %v268 = vunpack.c.l.b16 %v27
  %v269 = vunpack.c.h.b16 %v27
  %v270 = vunpack.c.l.b16 %v28
  %v271 = vunpack.c.h.b16 %v28
  %v272 = vunpack.c.l.b16 %v29
  %v273 = vunpack.c.h.b16 %v29
  %v274 = vunpack.c.l.b16 %v30
  %v275 = vunpack.c.h.b16 %v30
  %v276 = vunpack.c.l.b16 %v31
  %v277 = vunpack.c.h.b16 %v31
  %v278 = vunpack.c.l.b16 %v32
  %v279 = vunpack.c.h.b16 %v32
  %v280 = vunpack.c.l.b16 %v33
  %v281 = vunpack.c.h.b16 %v33
  %v282 = vunpack.c.l.b16 %v34
  %v283 = vunpack.c.h.b16 %v34
  %v284 = vunpack.c.l.b16 %v35
  %v285 = vunpack.c.h.b16 %v35
  %v286 = vunpack.c.l.b16 %v36
  %v287 = vunpack.c.h.b16 %v36
  %v288 = vunpack.c.l.b16 %v37
  %v289 = vunpack.c.h.b16 %v37
  %v290 = vunpack.c.l.b16 %v38
  %v291 = vunpack.c.h.b16 %v38
  %v292 = vunpack.c.l.b16 %v39
  %v293 = vunpack.c.h.b16 %v39
  %v294 = vunpack.c.l.b16 %v40
  %v295 = vunpack.c.h.b16 %v40
  %v296 = vunpack.c.l.b16 %v41
  %v297 = vunpack.c.h.b16 %v41
  %v298 = vunpack.c.l.b16 %v42
  %v299 = vunpack.c.h.b16 %v42
  %v300 = vunpack.c.l.b16 %v43
  %v301 = vunpack.c.h.b16 %v43
  %v302 = vunpack.c.l.b16 %v44
  %v303 = vunpack.c.h.b16 %v44
  %v304 = vunpack.c.l.b16 %v45
  %v305 = vunpack.c.h.b16 %v45
  %v306 = vunpack.c.l.b16 %v46
  %v307 = vunpack.c.h.b16 %v46
  %v308 = vunpack.c.l.b16 %v47
  %v309 = vunpack.c.h.b16 %v47
  %v310 = vunpack.c.l.b16 %v48
  %v311 = vunpack.c.h.b16 %v48
  %v312 = vunpack.c.l.b16 %v49
  %v313 = vunpack.c.h.b16 %v49
  %v314 = vunpack.c.l.b16 %v50
  %v315 = vunpack.c.h.b16 %v50
  %v316 = vunpack.c.l.b16 %v51
  %v317 = vunpack.c.h.b16 %v51
  %v318 = vunpack.c.l.b16 %v52
  %v319 = vunpack.c.h.b16 %v52
  %v320 = vunpack.c.l.b16 %v53
  %v321 = vunpack.c.h.b16 %v53
  %v322 = vunpack.c.l.b16 %v54
  %v323 = vunpack.c.h.b16 %v54
  %v324 = vunpack.c.l.b16 %v55
  %v325 = vunpack.c.h.b16 %v55
  %v326 = vunpack.c.l.b16 %v56
  %v327 = vunpack.c.h.b16 %v56
  %v328 = vunpack.c.l.b16 %v57
  %v329 = vunpack.c.h.b16 %v57
  %v330 = vunpack.c.l.b16 %v58
  %v331 = vunpack.c.h.b16 %v58
  %v332 = vunpack.c.l.b16 %v59
  %v333 = vunpack.c.h.b16 %v59
  %v334 = vunpack.c.l.b16 %v60
  %v335 = vunpack.c.h.b16 %v60
  %v336 = vunpack.c.l.b16 %v61
  %v337 = vunpack.c.h.b16 %v61
  %v338 = vunpack.c.l.b16 %v62
  %v339 = vunpack.c.h.b16 %v62
  %v340 = vunpack.c.l.b16 %v63
  %v341 = vunpack.c.h.b16 %v63
  %v342 = vunpack.c.l.b16 %v64
  %v343 = vunpack.c.h.b16 %v64
  %v344 = vunpack.c.l.b16 %v65
  %v345 = vunpack.c.h.b16 %v65
  %v346 = vunpack.c.l.b16 %v66
  %v347 = vunpack.c.h.b16 %v66
  %v348 = vunpack.c.l.b16 %v67
  %v349 = vunpack.c.h.b16 %v67
  %v350 = vunpack.c.l.b16 %v68
  %v351 = vunpack.c.h.b16 %v68
  %v352 = vunpack.c.l.b16 %v69
  %v353 = vunpack.c.h.b16 %v69
  %v354 = vunpack.c.l.b16 %v70
  %v355 = vunpack.c.h.b16 %v70
  %v356 = vunpack.c.l.b16 %v71
  %v357 = vunpack.c.h.b16 %v71
  %v358 = vunpack.c.l.b16 %v72
  %v359 = vunpack.c.h.b16 %v72
  %v360 = vunpack.c.l.b16 %v73
  %v361 = vunpack.c.h.b16 %v73
  %v362 = vunpack.c.l.b16 %v74
  %v363 = vunpack.c.h.b16 %v74
  %v364 = vunpack.c.l.b16 %v75
  %v365 = vunpack.c.h.b16 %v75
  %v366 = vunpack.c.l.b16 %v76
  %v367 = vunpack.c.h.b16 %v76
  %v368 = vunpack.c.l.b16 %v77
  %v369 = vunpack.c.h.b16 %v77
  %v370 = vunpack.c.l.b16 %v78
  %v371 = vunpack.c.h.b16 %v78
  %v372 = vunpack.c.l.b16 %v79
  %v373 = vunpack.c.h.b16 %v79
  %v374 = vunpack.c.l.b16 %v80
  %v375 = vunpack.c.h.b16 %v80
  %v376 = vunpack.c.l.b16 %v81
  %v377 = vunpack.c.h.b16 %v81
  %v378 = vunpack.c.l.b16 %v82
  %v379 = vunpack.c.h.b16 %v82
  %v380 = vunpack.c.l.b16 %v83
  %v381 = vunpack.c.h.b16 %v83
  %v382 = vunpack.c.l.b16 %v84
  %v383 = vunpack.c.h.b16 %v84
  %v384 = vunpack.c.l.b16 %v85
  %v385 = vunpack.c.h.b16 %v85
  %v386 = vunpack.c.l.b16 %v86
  %v387 = vunpack.c.h.b16 %v86
  %v388 = vunpack.c.l.b16 %v87
  %v389 = vunpack.c.h.b16 %v87
  %v390 = vunpack.c.l.b16 %v88
  %v391 = vunpack.c.h.b16 %v88
  %v392 = vunpack.c.l.b16 %v89
  %v393 = vunpack.c.h.b16 %v89
  %v394 = vpack.c.b16 %v256, %v250
  %v395 = vpack.c.b16 %v257, %v251
  %v396 = vpack.c.b16 %v258, %v252
  %v397 = vpack.c.b16 %v259, %v253
  %v398 = vpack.c.b16 %v260, %v254
  %v399 = vpack.c.b16 %v261, %v255
  %v400 = vpack.c.b16 %v268, %v262
  %v401 = vpack.c.b16 %v269, %v263
  %v402 = vpack.c.b16 %v270, %v264
  %v403 = vpack.c.b16 %v271, %v265
  %v404 = vpack.c.b16 %v272, %v266
  %v405 = vpack.c.b16 %v273, %v267
  %v406 = vpack.c.b16 %v280, %v274
  %v407 = vpack.c.b16 %v281, %v275
  %v408 = vpack.c.b16 %v282, %v276
  %v409 = vpack.c.b16 %v283, %v277
  %v410 = vpack.c.b16 %v284, %v278
  %v411 = vpack.c.b16 %v285, %v279
  %v412 = vpack.c.b16 %v292, %v286
  %v413 = vpack.c.b16 %v293, %v287
  %v414 = vpack.c.b16 %v294, %v288
  %v415 = vpack.c.b16 %v295, %v289
  %v416 = vpack.c.b16 %v296, %v290
  %v417 = vpack.c.b16 %v297, %v291
  %v418 = vpack.c.b16 %v304, %v298
  %v419 = vpack.c.b16 %v305, %v299
  %v420 = vpack.c.b16 %v306, %v300
  %v421 = vpack.c.b16 %v307, %v301
  %v422 = vpack.c.b16 %v308, %v302
  %v423 = vpack.c.b16 %v309, %v303
  %v424 = vpack.c.b16 %v316, %v310
  %v425 = vpack.c.b16 %v317, %v311
  %v426 = vpack.c.b16 %v318, %v312
  %v427 = vpack.c.b16 %v319, %v313
  %v428 = vpack.c.b16 %v320, %v314
  %v429 = vpack.c.b16 %v321, %v315
  %v430 = vpack.c.b16 %v328, %v322
  %v431 = vpack.c.b16 %v329, %v323
  %v432 = vpack.c.b16 %v330, %v324
  %v433 = vpack.c.b16 %v331, %v325
  %v434 = vpack.c.b16 %v332, %v326
  %v435 = vpack.c.b16 %v333, %v327
  %v436 = vpack.c.b16 %v340, %v334
  %v437 = vpack.c.b16 %v341, %v335
  %v438 = vpack.c.b16 %v342, %v336
  %v439 = vpack.c.b16 %v343, %v337
  %v440 = vpack.c.b16 %v344, %v338
  %v441 = vpack.c.b16 %v345, %v339
  %v442 = vpack.c.b16 %v352, %v346
  %v443 = vpack.c.b16 %v353, %v347
  %v444 = vpack.c.b16 %v354, %v348
  %v445 = vpack.c.b16 %v355, %v349
  %v446 = vpack.c.b16 %v356, %v350
  %v447 = vpack.c.b16 %v357, %v351
  %v448 = vpack.c.b16 %v364, %v358
  %v449 = vpack.c.b16 %v365, %v359
  %v450 = vpack.c.b16 %v366, %v360
  %v451 = vpack.c.b16 %v367, %v361
  %v452 = vpack.c.b16 %v368, %v362
  %v453 = vpack.c.b16 %v369, %v363
  %v454 = vpack.c.b16 %v376, %v370
  %v455 = vpack.c.b16 %v377, %v371
  %v456 = vpack.c.b16 %v378, %v372
  %v457 = vpack.c.b16 %v379, %v373
  %v458 = vpack.c.b16 %v380, %v374
  %v459 = vpack.c.b16 %v381, %v375
  %v460 = vpack.c.b16 %v388, %v382
  %v461 = vpack.c.b16 %v389, %v383
  %v462 = vpack.c.b16 %v390, %v384
  %v463 = vpack.c.b16 %v391, %v385
  %v464 = vpack.c.b16 %v392, %v386
  %v465 = vpack.c.b16 %v393, %v387
  %v607 = vunpack.c.l.b16 %v90
  %v608 = vunpack.c.l.b16 %v91
  %v609 = vunpack.c.l.b16 %v92
  %v610 = vunpack.c.l.b16 %v93
  %v611 = vunpack.c.l.b16 %v94
  %v612 = vunpack.c.l.b16 %v95
  %v613 = vunpack.c.l.b16 %v96
  %v614 = vunpack.c.l.b16 %v97
  %v615 = vunpack.c.l.b16 %v98
  %v616 = vunpack.c.l.b16 %v99
  %v617 = vunpack.c.l.b16 %v100
  %v618 = vunpack.c.l.b16 %v101
  %v619 = vunpack.c.l.b16 %v102
  %v620 = vunpack.c.l.b16 %v103
  %v621 = vunpack.c.l.b16 %v104
  %v622 = vunpack.c.l.b16 %v105
  %v623 = vunpack.c.l.b16 %v106
  %v624 = vunpack.c.l.b16 %v107
  %v625 = vunpack.c.l.b16 %v108
  %v626 = vunpack.c.l.b16 %v109
  %v627 = vunpack.c.l.b16 %v110
  %v628 = vunpack.c.l.b16 %v111
  %v629 = vunpack.c.l.b16 %v112
  %v630 = vunpack.c.l.b16 %v113
  %v631 = vunpack.c.l.b16 %v114
  %v632 = vunpack.c.l.b16 %v115
  %v633 = vunpack.c.l.b16 %v116
  %v634 = vunpack.c.l.b16 %v117
  %v635 = vunpack.c.l.b16 %v118
  %v636 = vunpack.c.l.b16 %v119
  %v637 = vunpack.c.l.b16 %v120
  %v638 = vunpack.c.l.b16 %v121
  %v639 = vunpack.c.l.b16 %v122
  %v640 = vunpack.c.l.b16 %v123
  %v641 = vunpack.c.l.b16 %v124
  %v642 = vunpack.c.l.b16 %v125
  %v643 = vunpack.c.l.b16 %v126
  %v644 = vunpack.c.l.b16 %v127
  %v645 = vunpack.c.l.b16 %v128
  %v646 = vunpack.c.l.b16 %v129
  %v647 = vunpack.c.l.b16 %v130
  %v648 = vunpack.c.l.b16 %v131
  %v649 = vunpack.c.l.b16 %v132
  %v650 = vunpack.c.l.b16 %v133
  %v651 = vunpack.c.l.b16 %v134
  %v652 = vunpack.c.l.b16 %v135
  %v653 = vunpack.c.l.b16 %v136
  %v654 = vunpack.c.l.b16 %v137
  %v655 = vunpack.c.l.b16 %v138
  %v656 = vunpack.c.l.b16 %v139
  %v657 = vunpack.c.l.b16 %v140
  %v658 = vunpack.c.l.b16 %v141
  %v659 = vunpack.c.l.b16 %v142
  %v660 = vunpack.c.l.b16 %v143
  %v661 = vunpack.c.l.b16 %v144
  %v662 = vunpack.c.l.b16 %v145
  %v663 = vunpack.c.l.b16 %v146
  %v664 = vunpack.c.l.b16 %v147
  %v665 = vunpack.c.l.b16 %v148
  %v666 = vunpack.c.l.b16 %v149
  %v667 = vunpack.c.l.b16 %v150
  %v668 = vunpack.c.l.b16 %v151
  %v669 = vunpack.c.l.b16 %v152
  %v670 = vunpack.c.l.b16 %v153
  %v671 = vunpack.c.l.b16 %v154
  %v672 = vunpack.c.l.b16 %v155
  %v673 = vunpack.c.l.b16 %v156
  %v674 = vunpack.c.l.b16 %v157
  %v675 = vunpack.c.l.b16 %v158
  %v676 = vunpack.c.l.b16 %v159
  %v677 = vunpack.c.l.b16 %v160
  %v678 = vunpack.c.l.b16 %v161
  %v679 = vunpack.c.l.b16 %v162
  %v680 = vunpack.c.l.b16 %v163
  %v681 = vunpack.c.l.b16 %v164
  %v682 = vunpack.c.l.b16 %v165
  %v683 = vunpack.c.l.b16 %v166
  %v684 = vunpack.c.l.b16 %v167
  %v685 = vunpack.c.l.b16 %v168
  %v686 = vunpack.c.l.b16 %v169
  %v687 = vunpack.c.l.b16 %v170
  %v688 = vpack.c.b16 %v608, %v607
  %v689 = vpack.c.b16 %v610, %v609
  %v690 = vpack.c.b16 %v612, %v611
  %v691 = vpack.c.b16 %v614, %v613
  %v692 = vpack.c.b16 %v616, %v615
  %v693 = vpack.c.b16 %v618, %v617
  %v694 = vpack.c.b16 %v620, %v619
  %v695 = vpack.c.b16 %v622, %v621
  %v696 = vpack.c.b16 %v624, %v623
  %v697 = vpack.c.b16 %v626, %v625
  %v698 = vpack.c.b16 %v628, %v627
  %v699 = vpack.c.b16 %v630, %v629
  %v700 = vpack.c.b16 %v632, %v631
  %v701 = vpack.c.b16 %v634, %v633
  %v702 = vpack.c.b16 %v636, %v635
  %v703 = vpack.c.b16 %v638, %v637
  %v704 = vpack.c.b16 %v640, %v639
  %v705 = vpack.c.b16 %v642, %v641
  %v706 = vpack.c.b16 %v644, %v643
  %v707 = vpack.c.b16 %v646, %v645
  %v708 = vpack.c.b16 %v648, %v647
  %v709 = vpack.c.b16 %v650, %v649
  %v710 = vpack.c.b16 %v652, %v651
  %v711 = vpack.c.b16 %v654, %v653
  %v712 = vpack.c.b16 %v656, %v655
  %v713 = vpack.c.b16 %v658, %v657
  %v714 = vpack.c.b16 %v660, %v659
  %v715 = vpack.c.b16 %v662, %v661
  %v716 = vpack.c.b16 %v664, %v663
  %v717 = vpack.c.b16 %v666, %v665
  %v718 = vpack.c.b16 %v668, %v667
  %v719 = vpack.c.b16 %v670, %v669
  %v720 = vpack.c.b16 %v672, %v671
  %v721 = vpack.c.b16 %v674, %v673
  %v722 = vpack.c.b16 %v676, %v675
  %v723 = vpack.c.b16 %v678, %v677
  %v724 = vpack.c.b16 %v680, %v679
  %v725 = vpack.c.b16 %v682, %v681
  %v726 = vpack.c.b16 %v684, %v683
  %v727 = vpack.c.b16 %v686, %v685
  %v728 = vpack.c.b16 %v687, %v687
  %vm769 = vcmask 64512
  %v771 = vsel %vm769, %v399, 0
  %v774 = vsel %vm769, %v405, 0
  %v777 = vsel %vm769, %v411, 0
  %v780 = vsel %vm769, %v417, 0
  %v783 = vsel %vm769, %v423, 0
  %v786 = vsel %vm769, %v429, 0
  %v789 = vsel %vm769, %v435, 0
  %v792 = vsel %vm769, %v441, 0
  %v795 = vsel %vm769, %v447, 0
  %v798 = vsel %vm769, %v453, 0
  %v801 = vsel %vm769, %v459, 0
  %v804 = vsel %vm769, %v465, 0
  %vm806 = vcmask 1043456
  %v808 = vsel %vm806, %v728, 0
  %810 = vmatprep.subr.bf16.mxu0 0
  %811 = vmatpush1.bf16.msra.mxu0 %v688
  %812 = vmatprep.subr.bf16.mxu0 0
  %813 = vmatpush1.bf16.msra.mxu0 %v689
  %814 = vmatprep.subr.bf16.mxu0 0
  %815 = vmatpush1.bf16.msra.mxu0 %v690
  %816 = vmatprep.subr.bf16.mxu0 0
  %817 = vmatpush1.bf16.msra.mxu0 %v691
  %818 = vmatprep.subr.bf16.mxu0 0
  %819 = vmatpush1.bf16.msra.mxu0 %v692
  %820 = vmatprep.subr.bf16.mxu0 0
  %821 = vmatpush1.bf16.msra.mxu0 %v693
  %822 = vmatprep.subr.bf16.mxu0 0
  %823 = vmatpush1.bf16.msra.mxu0 %v694
  %824 = vmatprep.subr.bf16.mxu0 0
  %825 = vmatpush1.bf16.msra.mxu0 %v695
  %826 = vmatprep.subr.bf16.mxu0 0
  %827 = vmatpush1.bf16.msra.mxu0 %v696
  %828 = vmatprep.subr.bf16.mxu0 0
  %829 = vmatpush1.bf16.msra.mxu0 %v697
  %830 = vmatprep.subr.bf16.mxu0 0
  %831 = vmatpush1.bf16.msra.mxu0 %v698
  %832 = vmatprep.subr.bf16.mxu0 0
  %833 = vmatpush1.bf16.msra.mxu0 %v699
  %834 = vmatprep.subr.bf16.mxu0 0
  %835 = vmatpush1.bf16.msra.mxu0 %v700
  %836 = vmatprep.subr.bf16.mxu0 0
  %837 = vmatpush1.bf16.msra.mxu0 %v701
  %838 = vmatprep.subr.bf16.mxu0 0
  %839 = vmatpush1.bf16.msra.mxu0 %v702
  %840 = vmatprep.subr.bf16.mxu0 0
  %841 = vmatpush1.bf16.msra.mxu0 %v703
  %842 = vmatprep.mubr.bf16.mxu0 %v395
  %843 = vmatmul.mubr.bf16.gmra.mrb[0].mxu0 %v394
  %v844 = vpop.f32.mrb[0].mxu0
  %v845 = vadd.f32 %v176, %v844
  %v846 = vpop.f32.mrb[0].mxu0
  %v847 = vpop.f32.mrb[0].mxu0
  %v848 = vadd.f32 %v176, %v847
  %v849 = vpop.f32.mrb[0].mxu0
  %850 = vmatprep.mubr.bf16.mxu0 %v401
  %851 = vmatmul.mubr.bf16.gmra.mrb[0].mxu0 %v400
  %v852 = vpop.f32.mrb[0].mxu0
  %v853 = vadd.f32 %v176, %v852
  %v854 = vpop.f32.mrb[0].mxu0
  %v855 = vpop.f32.mrb[0].mxu0
  %v856 = vadd.f32 %v176, %v855
  %v857 = vpop.f32.mrb[0].mxu0
  %858 = vmatprep.mubr.bf16.mxu0 %v407
  %859 = vmatmul.mubr.bf16.gmra.mrb[0].mxu0 %v406
  %v860 = vpop.f32.mrb[0].mxu0
  %v861 = vadd.f32 %v176, %v860
  %v862 = vpop.f32.mrb[0].mxu0
  %v863 = vpop.f32.mrb[0].mxu0
  %v864 = vadd.f32 %v176, %v863
  %v865 = vpop.f32.mrb[0].mxu0
  %866 = vmatprep.mubr.bf16.mxu0 %v413
  %867 = vmatmul.mubr.bf16.gmra.mrb[0].mxu0 %v412
  %v868 = vpop.f32.mrb[0].mxu0
  %v869 = vadd.f32 %v176, %v868
  %v870 = vpop.f32.mrb[0].mxu0
  %v871 = vpop.f32.mrb[0].mxu0
  %v872 = vadd.f32 %v176, %v871
  %v873 = vpop.f32.mrb[0].mxu0
  %874 = vmatprep.mubr.bf16.mxu0 %v419
  %875 = vmatmul.mubr.bf16.gmra.mrb[0].mxu0 %v418
  %v876 = vpop.f32.mrb[0].mxu0
  %v877 = vadd.f32 %v176, %v876
  %v878 = vpop.f32.mrb[0].mxu0
  %v879 = vpop.f32.mrb[0].mxu0
  %v880 = vadd.f32 %v176, %v879
  %v881 = vpop.f32.mrb[0].mxu0
  %882 = vmatprep.mubr.bf16.mxu0 %v425
  %883 = vmatmul.mubr.bf16.gmra.mrb[0].mxu0 %v424
  %v884 = vpop.f32.mrb[0].mxu0
  %v885 = vadd.f32 %v176, %v884
  %v886 = vpop.f32.mrb[0].mxu0
  %v887 = vpop.f32.mrb[0].mxu0
  %v888 = vadd.f32 %v176, %v887
  %v889 = vpop.f32.mrb[0].mxu0
  %890 = vmatprep.mubr.bf16.mxu0 %v431
  %891 = vmatmul.mubr.bf16.gmra.mrb[0].mxu0 %v430
  %v892 = vpop.f32.mrb[0].mxu0
  %v893 = vadd.f32 %v176, %v892
  %v894 = vpop.f32.mrb[0].mxu0
  %v895 = vpop.f32.mrb[0].mxu0
  %v896 = vadd.f32 %v176, %v895
  %v897 = vpop.f32.mrb[0].mxu0
  %898 = vmatprep.mubr.bf16.mxu0 %v437
  %899 = vmatmul.mubr.bf16.gmra.mrb[0].mxu0 %v436
  %v900 = vpop.f32.mrb[0].mxu0
  %v901 = vadd.f32 %v176, %v900
  %v902 = vpop.f32.mrb[0].mxu0
  %v903 = vpop.f32.mrb[0].mxu0
  %v904 = vadd.f32 %v176, %v903
  %v905 = vpop.f32.mrb[0].mxu0
  %906 = vmatprep.mubr.bf16.mxu0 %v443
  %907 = vmatmul.mubr.bf16.gmra.mrb[0].mxu0 %v442
  %v908 = vpop.f32.mrb[0].mxu0
  %v909 = vadd.f32 %v176, %v908
  %v910 = vpop.f32.mrb[0].mxu0
  %v911 = vpop.f32.mrb[0].mxu0
  %v912 = vadd.f32 %v176, %v911
  %v913 = vpop.f32.mrb[0].mxu0
  %914 = vmatprep.mubr.bf16.mxu0 %v449
  %915 = vmatmul.mubr.bf16.gmra.mrb[0].mxu0 %v448
  %v916 = vpop.f32.mrb[0].mxu0
  %v917 = vadd.f32 %v176, %v916
  %v918 = vpop.f32.mrb[0].mxu0
  %v919 = vpop.f32.mrb[0].mxu0
  %v920 = vadd.f32 %v176, %v919
  %v921 = vpop.f32.mrb[0].mxu0
  %922 = vmatprep.mubr.bf16.mxu0 %v455
  %923 = vmatmul.mubr.bf16.gmra.mrb[0].mxu0 %v454
  %v924 = vpop.f32.mrb[0].mxu0
  %v925 = vadd.f32 %v176, %v924
  %v926 = vpop.f32.mrb[0].mxu0
  %v927 = vpop.f32.mrb[0].mxu0
  %v928 = vadd.f32 %v176, %v927
  %v929 = vpop.f32.mrb[0].mxu0
  %930 = vmatprep.mubr.bf16.mxu0 %v461
  %931 = vmatmul.mubr.bf16.gmra.mrb[0].mxu0 %v460
  %v932 = vpop.f32.mrb[0].mxu0
  %v933 = vadd.f32 %v176, %v932
  %v934 = vpop.f32.mrb[0].mxu0
  %v935 = vpop.f32.mrb[0].mxu0
  %v936 = vadd.f32 %v176, %v935
  %v937 = vpop.f32.mrb[0].mxu0
  %938 = vdwg.mxu0
  %939 = vmatprep.subr.bf16.mxu0 0
  %940 = vmatpush1.bf16.msra.mxu0 %v704
  %941 = vmatprep.subr.bf16.mxu0 0
  %942 = vmatpush1.bf16.msra.mxu0 %v705
  %943 = vmatprep.subr.bf16.mxu0 0
  %944 = vmatpush1.bf16.msra.mxu0 %v706
  %945 = vmatprep.subr.bf16.mxu0 0
  %946 = vmatpush1.bf16.msra.mxu0 %v707
  %947 = vmatprep.subr.bf16.mxu0 0
  %948 = vmatpush1.bf16.msra.mxu0 %v708
  %949 = vmatprep.subr.bf16.mxu0 0
  %950 = vmatpush1.bf16.msra.mxu0 %v709
  %951 = vmatprep.subr.bf16.mxu0 0
  %952 = vmatpush1.bf16.msra.mxu0 %v710
  %953 = vmatprep.subr.bf16.mxu0 0
  %954 = vmatpush1.bf16.msra.mxu0 %v711
  %955 = vmatprep.subr.bf16.mxu0 0
  %956 = vmatpush1.bf16.msra.mxu0 %v712
  %957 = vmatprep.subr.bf16.mxu0 0
  %958 = vmatpush1.bf16.msra.mxu0 %v713
  %959 = vmatprep.subr.bf16.mxu0 0
  %960 = vmatpush1.bf16.msra.mxu0 %v714
  %961 = vmatprep.subr.bf16.mxu0 0
  %962 = vmatpush1.bf16.msra.mxu0 %v715
  %963 = vmatprep.subr.bf16.mxu0 0
  %964 = vmatpush1.bf16.msra.mxu0 %v716
  %965 = vmatprep.subr.bf16.mxu0 0
  %966 = vmatpush1.bf16.msra.mxu0 %v717
  %967 = vmatprep.subr.bf16.mxu0 0
  %968 = vmatpush1.bf16.msra.mxu0 %v718
  %969 = vmatprep.subr.bf16.mxu0 0
  %970 = vmatpush1.bf16.msra.mxu0 %v719
  %971 = vmatprep.mubr.bf16.mxu0 %v397
  %972 = vmatmul.mubr.bf16.gmra.mrb[0].mxu0 %v396
  %v973 = vpop.f32.mrb[0].mxu0
  %v974 = vadd.f32 %v845, %v973
  %v975 = vpop.f32.mrb[0].mxu0
  %v976 = vpop.f32.mrb[0].mxu0
  %v977 = vadd.f32 %v848, %v976
  %v978 = vpop.f32.mrb[0].mxu0
  %979 = vmatprep.mubr.bf16.mxu0 %v403
  %980 = vmatmul.mubr.bf16.gmra.mrb[0].mxu0 %v402
  %v981 = vpop.f32.mrb[0].mxu0
  %v982 = vadd.f32 %v853, %v981
  %v983 = vpop.f32.mrb[0].mxu0
  %v984 = vpop.f32.mrb[0].mxu0
  %v985 = vadd.f32 %v856, %v984
  %v986 = vpop.f32.mrb[0].mxu0
  %987 = vmatprep.mubr.bf16.mxu0 %v409
  %988 = vmatmul.mubr.bf16.gmra.mrb[0].mxu0 %v408
  %v989 = vpop.f32.mrb[0].mxu0
  %v990 = vadd.f32 %v861, %v989
  %v991 = vpop.f32.mrb[0].mxu0
  %v992 = vpop.f32.mrb[0].mxu0
  %v993 = vadd.f32 %v864, %v992
  %v994 = vpop.f32.mrb[0].mxu0
  %995 = vmatprep.mubr.bf16.mxu0 %v415
  %996 = vmatmul.mubr.bf16.gmra.mrb[0].mxu0 %v414
  %v997 = vpop.f32.mrb[0].mxu0
  %v998 = vadd.f32 %v869, %v997
  %v999 = vpop.f32.mrb[0].mxu0
  %v1000 = vpop.f32.mrb[0].mxu0
  %v1001 = vadd.f32 %v872, %v1000
  %v1002 = vpop.f32.mrb[0].mxu0
  %1003 = vmatprep.mubr.bf16.mxu0 %v421
  %1004 = vmatmul.mubr.bf16.gmra.mrb[0].mxu0 %v420
  %v1005 = vpop.f32.mrb[0].mxu0
  %v1006 = vadd.f32 %v877, %v1005
  %v1007 = vpop.f32.mrb[0].mxu0
  %v1008 = vpop.f32.mrb[0].mxu0
  %v1009 = vadd.f32 %v880, %v1008
  %v1010 = vpop.f32.mrb[0].mxu0
  %1011 = vmatprep.mubr.bf16.mxu0 %v427
  %1012 = vmatmul.mubr.bf16.gmra.mrb[0].mxu0 %v426
  %v1013 = vpop.f32.mrb[0].mxu0
  %v1014 = vadd.f32 %v885, %v1013
  %v1015 = vpop.f32.mrb[0].mxu0
  %v1016 = vpop.f32.mrb[0].mxu0
  %v1017 = vadd.f32 %v888, %v1016
  %v1018 = vpop.f32.mrb[0].mxu0
  %1019 = vmatprep.mubr.bf16.mxu0 %v433
  %1020 = vmatmul.mubr.bf16.gmra.mrb[0].mxu0 %v432
  %v1021 = vpop.f32.mrb[0].mxu0
  %v1022 = vadd.f32 %v893, %v1021
  %v1023 = vpop.f32.mrb[0].mxu0
  %v1024 = vpop.f32.mrb[0].mxu0
  %v1025 = vadd.f32 %v896, %v1024
  %v1026 = vpop.f32.mrb[0].mxu0
  %1027 = vmatprep.mubr.bf16.mxu0 %v439
  %1028 = vmatmul.mubr.bf16.gmra.mrb[0].mxu0 %v438
  %v1029 = vpop.f32.mrb[0].mxu0
  %v1030 = vadd.f32 %v901, %v1029
  %v1031 = vpop.f32.mrb[0].mxu0
  %v1032 = vpop.f32.mrb[0].mxu0
  %v1033 = vadd.f32 %v904, %v1032
  %v1034 = vpop.f32.mrb[0].mxu0
  %1035 = vmatprep.mubr.bf16.mxu0 %v445
  %1036 = vmatmul.mubr.bf16.gmra.mrb[0].mxu0 %v444
  %v1037 = vpop.f32.mrb[0].mxu0
  %v1038 = vadd.f32 %v909, %v1037
  %v1039 = vpop.f32.mrb[0].mxu0
  %v1040 = vpop.f32.mrb[0].mxu0
  %v1041 = vadd.f32 %v912, %v1040
  %v1042 = vpop.f32.mrb[0].mxu0
  %1043 = vmatprep.mubr.bf16.mxu0 %v451
  %1044 = vmatmul.mubr.bf16.gmra.mrb[0].mxu0 %v450
  %v1045 = vpop.f32.mrb[0].mxu0
  %v1046 = vadd.f32 %v917, %v1045
  %v1047 = vpop.f32.mrb[0].mxu0
  %v1048 = vpop.f32.mrb[0].mxu0
  %v1049 = vadd.f32 %v920, %v1048
  %v1050 = vpop.f32.mrb[0].mxu0
  %1051 = vmatprep.mubr.bf16.mxu0 %v457
  %1052 = vmatmul.mubr.bf16.gmra.mrb[0].mxu0 %v456
  %v1053 = vpop.f32.mrb[0].mxu0
  %v1054 = vadd.f32 %v925, %v1053
  %v1055 = vpop.f32.mrb[0].mxu0
  %v1056 = vpop.f32.mrb[0].mxu0
  %v1057 = vadd.f32 %v928, %v1056
  %v1058 = vpop.f32.mrb[0].mxu0
  %1059 = vmatprep.mubr.bf16.mxu0 %v463
  %1060 = vmatmul.mubr.bf16.gmra.mrb[0].mxu0 %v462
  %v1061 = vpop.f32.mrb[0].mxu0
  %v1062 = vadd.f32 %v933, %v1061
  %v1063 = vpop.f32.mrb[0].mxu0
  %v1064 = vpop.f32.mrb[0].mxu0
  %v1065 = vadd.f32 %v936, %v1064
  %v1066 = vpop.f32.mrb[0].mxu0
  %1067 = vdwg.mxu0
  %1068 = vmatprep.subr.bf16.mxu0 0
  %1069 = vmatpush1.bf16.msra.mxu0 %v720
  %1070 = vmatprep.subr.bf16.mxu0 0
  %1071 = vmatpush1.bf16.msra.mxu0 %v721
  %1072 = vmatprep.subr.bf16.mxu0 0
  %1073 = vmatpush1.bf16.msra.mxu0 %v722
  %1074 = vmatprep.subr.bf16.mxu0 0
  %1075 = vmatpush1.bf16.msra.mxu0 %v723
  %1076 = vmatprep.subr.bf16.mxu0 0
  %1077 = vmatpush1.bf16.msra.mxu0 %v724
  %1078 = vmatprep.subr.bf16.mxu0 0
  %1079 = vmatpush1.bf16.msra.mxu0 %v725
  %1080 = vmatprep.subr.bf16.mxu0 0
  %1081 = vmatpush1.bf16.msra.mxu0 %v726
  %1082 = vmatprep.subr.bf16.mxu0 0
  %1083 = vmatpush1.bf16.msra.mxu0 %v727
  %1084 = vmatprep.subr.bf16.mxu0 0
  %1085 = vmatpush1.bf16.msra.mxu0 %v808
  %1086 = vmatprep.subr.bf16.mxu0 0
  %1087 = vmatpush1.bf16.msra.mxu0 0
  %1088 = vmatprep.subr.bf16.mxu0 0
  %1089 = vmatpush1.bf16.msra.mxu0 0
  %1090 = vmatprep.subr.bf16.mxu0 0
  %1091 = vmatpush1.bf16.msra.mxu0 0
  %1092 = vmatprep.subr.bf16.mxu0 0
  %1093 = vmatpush1.bf16.msra.mxu0 0
  %1094 = vmatprep.subr.bf16.mxu0 0
  %1095 = vmatpush1.bf16.msra.mxu0 0
  %1096 = vmatprep.subr.bf16.mxu0 0
  %1097 = vmatpush1.bf16.msra.mxu0 0
  %1098 = vmatprep.subr.bf16.mxu0 0
  %1099 = vmatpush1.bf16.msra.mxu0 0
  %1100 = vmatprep.mubr.bf16.mxu0 %v771
  %1101 = vmatmul.mubr.bf16.gmra.mrb[0].mxu0 %v398
  %v1102 = vpop.f32.mrb[0].mxu0
  %v1103 = vadd.f32 %v974, %v1102
  %v1104 = vpop.f32.mrb[0].mxu0
  %v1105 = vpop.f32.mrb[0].mxu0
  %v1106 = vadd.f32 %v977, %v1105
  %v1107 = vpop.f32.mrb[0].mxu0
  %1108 = vmatprep.mubr.bf16.mxu0 %v774
  %1109 = vmatmul.mubr.bf16.gmra.mrb[0].mxu0 %v404
  %v1110 = vpop.f32.mrb[0].mxu0
  %v1111 = vadd.f32 %v982, %v1110
  %v1112 = vpop.f32.mrb[0].mxu0
  %v1113 = vpop.f32.mrb[0].mxu0
  %v1114 = vadd.f32 %v985, %v1113
  %v1115 = vpop.f32.mrb[0].mxu0
  %1116 = vmatprep.mubr.bf16.mxu0 %v777
  %1117 = vmatmul.mubr.bf16.gmra.mrb[0].mxu0 %v410
  %v1118 = vpop.f32.mrb[0].mxu0
  %v1119 = vadd.f32 %v990, %v1118
  %v1120 = vpop.f32.mrb[0].mxu0
  %v1121 = vpop.f32.mrb[0].mxu0
  %v1122 = vadd.f32 %v993, %v1121
  %v1123 = vpop.f32.mrb[0].mxu0
  %1124 = vmatprep.mubr.bf16.mxu0 %v780
  %1125 = vmatmul.mubr.bf16.gmra.mrb[0].mxu0 %v416
  %v1126 = vpop.f32.mrb[0].mxu0
  %v1127 = vadd.f32 %v998, %v1126
  %v1128 = vpop.f32.mrb[0].mxu0
  %v1129 = vpop.f32.mrb[0].mxu0
  %v1130 = vadd.f32 %v1001, %v1129
  %v1131 = vpop.f32.mrb[0].mxu0
  %1132 = vmatprep.mubr.bf16.mxu0 %v783
  %1133 = vmatmul.mubr.bf16.gmra.mrb[0].mxu0 %v422
  %v1134 = vpop.f32.mrb[0].mxu0
  %v1135 = vadd.f32 %v1006, %v1134
  %v1136 = vpop.f32.mrb[0].mxu0
  %v1137 = vpop.f32.mrb[0].mxu0
  %v1138 = vadd.f32 %v1009, %v1137
  %v1139 = vpop.f32.mrb[0].mxu0
  %1140 = vmatprep.mubr.bf16.mxu0 %v786
  %1141 = vmatmul.mubr.bf16.gmra.mrb[0].mxu0 %v428
  %v1142 = vpop.f32.mrb[0].mxu0
  %v1143 = vadd.f32 %v1014, %v1142
  %v1144 = vpop.f32.mrb[0].mxu0
  %v1145 = vpop.f32.mrb[0].mxu0
  %v1146 = vadd.f32 %v1017, %v1145
  %v1147 = vpop.f32.mrb[0].mxu0
  %1148 = vmatprep.mubr.bf16.mxu0 %v789
  %1149 = vmatmul.mubr.bf16.gmra.mrb[0].mxu0 %v434
  %v1150 = vpop.f32.mrb[0].mxu0
  %v1151 = vadd.f32 %v1022, %v1150
  %v1152 = vpop.f32.mrb[0].mxu0
  %v1153 = vpop.f32.mrb[0].mxu0
  %v1154 = vadd.f32 %v1025, %v1153
  %v1155 = vpop.f32.mrb[0].mxu0
  %1156 = vmatprep.mubr.bf16.mxu0 %v792
  %1157 = vmatmul.mubr.bf16.gmra.mrb[0].mxu0 %v440
  %v1158 = vpop.f32.mrb[0].mxu0
  %v1159 = vadd.f32 %v1030, %v1158
  %v1160 = vpop.f32.mrb[0].mxu0
  %v1161 = vpop.f32.mrb[0].mxu0
  %v1162 = vadd.f32 %v1033, %v1161
  %v1163 = vpop.f32.mrb[0].mxu0
  %1164 = vmatprep.mubr.bf16.mxu0 %v795
  %1165 = vmatmul.mubr.bf16.gmra.mrb[0].mxu0 %v446
  %v1166 = vpop.f32.mrb[0].mxu0
  %v1167 = vadd.f32 %v1038, %v1166
  %v1168 = vpop.f32.mrb[0].mxu0
  %v1169 = vpop.f32.mrb[0].mxu0
  %v1170 = vadd.f32 %v1041, %v1169
  %v1171 = vpop.f32.mrb[0].mxu0
  %1172 = vmatprep.mubr.bf16.mxu0 %v798
  %1173 = vmatmul.mubr.bf16.gmra.mrb[0].mxu0 %v452
  %v1174 = vpop.f32.mrb[0].mxu0
  %v1175 = vadd.f32 %v1046, %v1174
  %v1176 = vpop.f32.mrb[0].mxu0
  %v1177 = vpop.f32.mrb[0].mxu0
  %v1178 = vadd.f32 %v1049, %v1177
  %v1179 = vpop.f32.mrb[0].mxu0
  %1180 = vmatprep.mubr.bf16.mxu0 %v801
  %1181 = vmatmul.mubr.bf16.gmra.mrb[0].mxu0 %v458
  %v1182 = vpop.f32.mrb[0].mxu0
  %v1183 = vadd.f32 %v1054, %v1182
  %v1184 = vpop.f32.mrb[0].mxu0
  %v1185 = vpop.f32.mrb[0].mxu0
  %v1186 = vadd.f32 %v1057, %v1185
  %v1187 = vpop.f32.mrb[0].mxu0
  %1188 = vmatprep.mubr.bf16.mxu0 %v804
  %1189 = vmatmul.mubr.bf16.gmra.mrb[0].mxu0 %v464
  %v1190 = vpop.f32.mrb[0].mxu0
  %v1191 = vadd.f32 %v1062, %v1190
  %v1192 = vpop.f32.mrb[0].mxu0
  %v1193 = vpop.f32.mrb[0].mxu0
  %v1194 = vadd.f32 %v1065, %v1193
  %v1195 = vpop.f32.mrb[0].mxu0
  %1196 = vdwg.mxu0
  %1197 = vst [vmem:[%s3] sm:$0xff] %v1103
  %1198 = vst [vmem:[%s3 + $0x8] sm:$0xff] %v1106
  %1199 = vst [vmem:[%s3 + $0x10] sm:$0xff] %v1111
  %1200 = vst [vmem:[%s3 + $0x18] sm:$0xff] %v1114
  %1201 = vst [vmem:[%s3 + $0x20] sm:$0xff] %v1119
  %1202 = vst [vmem:[%s3 + $0x28] sm:$0xff] %v1122
  %1203 = vst [vmem:[%s3 + $0x30] sm:$0xff] %v1127
  %1204 = vst [vmem:[%s3 + $0x38] sm:$0xff] %v1130
  %1205 = vst [vmem:[%s3 + $0x40] sm:$0xff] %v1135
  %1206 = vst [vmem:[%s3 + $0x48] sm:$0xff] %v1138
  %1207 = vst [vmem:[%s3 + $0x50] sm:$0xff] %v1143
  %1208 = vst [vmem:[%s3 + $0x58] sm:$0xff] %v1146
  %1209 = vst [vmem:[%s3 + $0x60] sm:$0xff] %v1151
  %1210 = vst [vmem:[%s3 + $0x68] sm:$0xff] %v1154
  %1211 = vst [vmem:[%s3 + $0x70] sm:$0xff] %v1159
  %1212 = vst [vmem:[%s3 + $0x78] sm:$0xff] %v1162
  %1213 = vst [vmem:[%s3 + $0x80] sm:$0xff] %v1167
  %1214 = vst [vmem:[%s3 + $0x88] sm:$0xff] %v1170
  %1215 = vst [vmem:[%s3 + $0x90] sm:$0xff] %v1175
  %1216 = vst [vmem:[%s3 + $0x98] sm:$0xff] %v1178
  %1217 = vst [vmem:[%s3 + $0xa0] sm:$0xff] %v1183
  %1218 = vst [vmem:[%s3 + $0xa8] sm:$0xff] %v1186
  %1219 = vst [vmem:[%s3 + $0xb0] sm:$0xff] %v1191
  %1220 = vst [vmem:[%s3 + $0xb8] sm:$0xff] %v1194
  %v1221 = vadd.f32 %v1103, %v1106
  %v1222 = vadd.f32 %v1221, %v1111
  %v1223 = vadd.f32 %v1222, %v1114
  %v1224 = vadd.f32 %v1223, %v1119
  %v1225 = vadd.f32 %v1224, %v1122
  %v1226 = vadd.f32 %v1225, %v1127
  %v1227 = vadd.f32 %v1226, %v1130
  %v1228 = vadd.f32 %v1227, %v1135
  %v1229 = vadd.f32 %v1228, %v1138
  %v1230 = vadd.f32 %v1229, %v1143
  %v1231 = vadd.f32 %v1230, %v1146
  %v1232 = vadd.f32 %v1231, %v1151
  %v1233 = vadd.f32 %v1232, %v1154
  %v1234 = vadd.f32 %v1233, %v1159
  %v1235 = vadd.f32 %v1234, %v1162
  %v1236 = vadd.f32 %v1235, %v1167
  %v1237 = vadd.f32 %v1236, %v1170
  %v1238 = vadd.f32 %v1237, %v1175
  %v1239 = vadd.f32 %v1238, %v1178
  %v1240 = vadd.f32 %v1239, %v1183
  %v1241 = vadd.f32 %v1240, %v1186
  %v1242 = vadd.f32 %v1241, %v1191
  %v1243 = vadd.f32 %v1242, %v1194
  %v1244 = vrot.slane %v1243, 4
  %v1245 = vadd.f32 %v1243, %v1244
  %v1246 = vrot.slane %v1245, 2
  %v1247 = vadd.f32 %v1245, %v1246
  %v1248 = vrot.slane %v1247, 1
  %v1249 = vadd.f32 %v1247, %v1248
  %1250 = vst [vmem:[%s4] sm:$0x1] %v1249
  %v1251 = vmul.f32 %v1103, %v1103
  %v1252 = vmul.f32 %v1106, %v1106
  %v1253 = vmul.f32 %v1111, %v1111
  %v1254 = vmul.f32 %v1114, %v1114
  %v1255 = vmul.f32 %v1119, %v1119
  %v1256 = vmul.f32 %v1122, %v1122
  %v1257 = vmul.f32 %v1127, %v1127
  %v1258 = vmul.f32 %v1130, %v1130
  %v1259 = vmul.f32 %v1135, %v1135
  %v1260 = vmul.f32 %v1138, %v1138
  %v1261 = vmul.f32 %v1143, %v1143
  %v1262 = vmul.f32 %v1146, %v1146
  %v1263 = vmul.f32 %v1151, %v1151
  %v1264 = vmul.f32 %v1154, %v1154
  %v1265 = vmul.f32 %v1159, %v1159
  %v1266 = vmul.f32 %v1162, %v1162
  %v1267 = vmul.f32 %v1167, %v1167
  %v1268 = vmul.f32 %v1170, %v1170
  %v1269 = vmul.f32 %v1175, %v1175
  %v1270 = vmul.f32 %v1178, %v1178
  %v1271 = vmul.f32 %v1183, %v1183
  %v1272 = vmul.f32 %v1186, %v1186
  %v1273 = vmul.f32 %v1191, %v1191
  %v1274 = vmul.f32 %v1194, %v1194
  %v1275 = vadd.f32 %v1251, %v1252
  %v1276 = vadd.f32 %v1275, %v1253
  %v1277 = vadd.f32 %v1276, %v1254
  %v1278 = vadd.f32 %v1277, %v1255
  %v1279 = vadd.f32 %v1278, %v1256
  %v1280 = vadd.f32 %v1279, %v1257
  %v1281 = vadd.f32 %v1280, %v1258
  %v1282 = vadd.f32 %v1281, %v1259
  %v1283 = vadd.f32 %v1282, %v1260
  %v1284 = vadd.f32 %v1283, %v1261
  %v1285 = vadd.f32 %v1284, %v1262
  %v1286 = vadd.f32 %v1285, %v1263
  %v1287 = vadd.f32 %v1286, %v1264
  %v1288 = vadd.f32 %v1287, %v1265
  %v1289 = vadd.f32 %v1288, %v1266
  %v1290 = vadd.f32 %v1289, %v1267
  %v1291 = vadd.f32 %v1290, %v1268
  %v1292 = vadd.f32 %v1291, %v1269
  %v1293 = vadd.f32 %v1292, %v1270
  %v1294 = vadd.f32 %v1293, %v1271
  %v1295 = vadd.f32 %v1294, %v1272
  %v1296 = vadd.f32 %v1295, %v1273
  %v1297 = vadd.f32 %v1296, %v1274
  %v1298 = vrot.slane %v1297, 4
  %v1299 = vadd.f32 %v1297, %v1298
  %v1300 = vrot.slane %v1299, 2
  %v1301 = vadd.f32 %v1299, %v1300
  %v1302 = vrot.slane %v1301, 1
  %v1303 = vadd.f32 %v1301, %v1302
  %1304 = vst [vmem:[%s5] sm:$0x1] %v1303
  // Predicated region
  $region14: #{rnet_not_factorized_forward.3} parent=0 // pred_check
    _
  $region15: #{rnet_not_factorized_forward.3} parent=0 // pred_check_branch
    %1306 = sbr.rel (0) target = $region17
  $region16: #{rnet_not_factorized_forward.3} parent=0 // pred_region
    _
  $region17: #{rnet_not_factorized_forward.3} parent=0 // pred_fallthru
    _
  // Predicated region
  $region18: #{rnet_not_factorized_forward.3} parent=0 // pred_check
    _
  $region19: #{rnet_not_factorized_forward.3} parent=0 // pred_check_branch
    %1308 = sbr.rel (0) target = $region21
  $region20: #{rnet_not_factorized_forward.3} parent=0 // pred_region
    _
  $region21: #{rnet_not_factorized_forward.3} parent=0 // pred_fallthru
    _
  // Predicated region
  $region22: #{rnet_not_factorized_forward.3} parent=0 // pred_check
    _
  $region23: #{rnet_not_factorized_forward.3} parent=0 // pred_check_branch
    %1310 = sbr.rel (0) target = $region25
  $region24: #{rnet_not_factorized_forward.3} parent=0 // pred_region
    _
  $region25: #{rnet_not_factorized_forward.3} parent=0 // pred_fallthru
    _
  // Predicated region
  $region26: #{rnet_not_factorized_forward.3} parent=0 // pred_check
    _
  $region27: #{rnet_not_factorized_forward.3} parent=0 // pred_check_branch
    %1312 = sbr.rel (0) target = $region29
  $region28: #{rnet_not_factorized_forward.3} parent=0 // pred_region
    _
  $region29: #{rnet_not_factorized_forward.3} parent=0 // pred_fallthru
    _
  // Predicated region
  $region30: #{rnet_not_factorized_forward.3} parent=0 // pred_check
    _
  $region31: #{rnet_not_factorized_forward.3} parent=0 // pred_check_branch
    %1314 = sbr.rel (0) target = $region33
  $region32: #{rnet_not_factorized_forward.3} parent=0 // pred_region
    _
  $region33: #{rnet_not_factorized_forward.3} parent=0 // pred_fallthru
    _
  // Predicated region
  $region34: #{rnet_not_factorized_forward.3} parent=0 // pred_check
    _
  $region35: #{rnet_not_factorized_forward.3} parent=0 // pred_check_branch
    %1316 = sbr.rel (0) target = $region37
  $region36: #{rnet_not_factorized_forward.3} parent=0 // pred_region
    _
  $region37: #{rnet_not_factorized_forward.3} parent=0 // pred_fallthru
    _

// kernel: rnet_not_factorized_forward.4
$region0: #{rnet_not_factorized_forward.4}
  #allocation0 [shape = 'u32[]', space=smem, size = 0x4, offset = 0x4, fixed_abs, tag = 'smem constant byte address 0x4 - core index']
  #allocation1 [shape = 'u32[144,128]{1,0:T(1,128)}', space=vmem, size = 0x12000, scoped, tag = 'internal scratch']
  %s0 = inlined_call_operand.vmem [shape: bf16[64,128], index: 0, kind: input, shape index: {}]
  %s1 = inlined_call_operand.vmem [shape: bf16[128,128], index: 1, kind: input, shape index: {}]
  %s2 = inlined_call_operand.vmem [shape: f32[1,128], index: 2, kind: input, shape index: {}]
  %s3 = inlined_call_operand.vmem [shape: f32[64,128], index: 3, kind: output, shape index: {0}]
  %s4 = inlined_call_operand.vmem [shape: f32[1,128], index: 4, kind: output, shape index: {1}]
  %s5 = inlined_call_operand.vmem [shape: f32[1,128], index: 5, kind: output, shape index: {2}]
  %6 = xla_tuple %s3, %s4, %s5
  %s7 = sld [smem:[#allocation0]]
  $region38: #{rnet_not_factorized_forward.4} parent=0
    _
  %s9 = ssub.s32 1, %s7
  %s10 = scalar_select 0, %s9, %s7
  // Predicated region
  $region2: #{rnet_not_factorized_forward.4} parent=0 // pred_check
    _
  $region3: #{rnet_not_factorized_forward.4} parent=0 // pred_check_branch
    %12 = sbr.rel (0) target = $region5
  $region4: #{rnet_not_factorized_forward.4} parent=0 // pred_region
    _
  $region5: #{rnet_not_factorized_forward.4} parent=0 // pred_fallthru
    _
  // Predicated region
  $region6: #{rnet_not_factorized_forward.4} parent=0 // pred_check
    _
  $region7: #{rnet_not_factorized_forward.4} parent=0 // pred_check_branch
    %14 = sbr.rel (0) target = $region9
  $region8: #{rnet_not_factorized_forward.4} parent=0 // pred_region
    _
  $region9: #{rnet_not_factorized_forward.4} parent=0 // pred_fallthru
    _
  // Predicated region
  $region10: #{rnet_not_factorized_forward.4} parent=0 // pred_check
    _
  $region11: #{rnet_not_factorized_forward.4} parent=0 // pred_check_branch
    %16 = sbr.rel (0) target = $region13
  $region12: #{rnet_not_factorized_forward.4} parent=0 // pred_region
    _
  $region13: #{rnet_not_factorized_forward.4} parent=0 // pred_fallthru
    _
  %v18 = vld [vmem:[%s0] sm:$0xf]
  %v19 = vld [vmem:[%s0 + $0x4] sm:$0xf]
  %v20 = vld [vmem:[%s0 + $0x8] sm:$0xf]
  %v21 = vld [vmem:[%s0 + $0xc] sm:$0xf]
  %v22 = vld [vmem:[%s0 + $0x10] sm:$0xf]
  %v23 = vld [vmem:[%s0 + $0x14] sm:$0xf]
  %v24 = vld [vmem:[%s0 + $0x18] sm:$0xf]
  %v25 = vld [vmem:[%s0 + $0x1c] sm:$0xf]
  %v26 = vld [vmem:[%s1] sm:$0xf]
  %v27 = vld [vmem:[%s1 + $0x4] sm:$0xf]
  %v28 = vld [vmem:[%s1 + $0x8] sm:$0xf]
  %v29 = vld [vmem:[%s1 + $0xc] sm:$0xf]
  %v30 = vld [vmem:[%s1 + $0x10] sm:$0xf]
  %v31 = vld [vmem:[%s1 + $0x14] sm:$0xf]
  %v32 = vld [vmem:[%s1 + $0x18] sm:$0xf]
  %v33 = vld [vmem:[%s1 + $0x1c] sm:$0xf]
  %v34 = vld [vmem:[%s1 + $0x20] sm:$0xf]
  %v35 = vld [vmem:[%s1 + $0x24] sm:$0xf]
  %v36 = vld [vmem:[%s1 + $0x28] sm:$0xf]
  %v37 = vld [vmem:[%s1 + $0x2c] sm:$0xf]
  %v38 = vld [vmem:[%s1 + $0x30] sm:$0xf]
  %v39 = vld [vmem:[%s1 + $0x34] sm:$0xf]
  %v40 = vld [vmem:[%s1 + $0x38] sm:$0xf]
  %v41 = vld [vmem:[%s1 + $0x3c] sm:$0xf]
  %v42 = vld [vmem:[%s2] sm:$0x1]
  %v44 = vlaneseq
  %v45 = vshrl.u32 %v44, 7
  %v46 = vsub.s32 0, %v45
  %v47 = vrot.slane %v42, %v46
  %v57 = vunpack.c.l.b16 %v18
  %v58 = vunpack.c.l.b16 %v19
  %v59 = vunpack.c.l.b16 %v20
  %v60 = vunpack.c.l.b16 %v21
  %v61 = vunpack.c.l.b16 %v22
  %v62 = vunpack.c.l.b16 %v23
  %v63 = vunpack.c.l.b16 %v24
  %v64 = vunpack.c.l.b16 %v25
  %v65 = vpack.c.b16 %v58, %v57
  %v66 = vpack.c.b16 %v60, %v59
  %v67 = vpack.c.b16 %v62, %v61
  %v68 = vpack.c.b16 %v64, %v63
  %v89 = vunpack.c.l.b16 %v26
  %v90 = vunpack.c.l.b16 %v27
  %v91 = vunpack.c.l.b16 %v28
  %v92 = vunpack.c.l.b16 %v29
  %v93 = vunpack.c.l.b16 %v30
  %v94 = vunpack.c.l.b16 %v31
  %v95 = vunpack.c.l.b16 %v32
  %v96 = vunpack.c.l.b16 %v33
  %v97 = vunpack.c.l.b16 %v34
  %v98 = vunpack.c.l.b16 %v35
  %v99 = vunpack.c.l.b16 %v36
  %v100 = vunpack.c.l.b16 %v37
  %v101 = vunpack.c.l.b16 %v38
  %v102 = vunpack.c.l.b16 %v39
  %v103 = vunpack.c.l.b16 %v40
  %v104 = vunpack.c.l.b16 %v41
  %v105 = vpack.c.b16 %v90, %v89
  %v106 = vpack.c.b16 %v92, %v91
  %v107 = vpack.c.b16 %v94, %v93
  %v108 = vpack.c.b16 %v96, %v95
  %v109 = vpack.c.b16 %v98, %v97
  %v110 = vpack.c.b16 %v100, %v99
  %v111 = vpack.c.b16 %v102, %v101
  %v112 = vpack.c.b16 %v104, %v103
  %121 = vmatprep.subr.bf16.mxu0 0
  %122 = vmatpush1.bf16.msra.mxu0 %v105
  %123 = vmatprep.subr.bf16.mxu0 0
  %124 = vmatpush1.bf16.msra.mxu0 %v106
  %125 = vmatprep.subr.bf16.mxu0 0
  %126 = vmatpush1.bf16.msra.mxu0 %v107
  %127 = vmatprep.subr.bf16.mxu0 0
  %128 = vmatpush1.bf16.msra.mxu0 %v108
  %129 = vmatprep.subr.bf16.mxu0 0
  %130 = vmatpush1.bf16.msra.mxu0 %v109
  %131 = vmatprep.subr.bf16.mxu0 0
  %132 = vmatpush1.bf16.msra.mxu0 %v110
  %133 = vmatprep.subr.bf16.mxu0 0
  %134 = vmatpush1.bf16.msra.mxu0 %v111
  %135 = vmatprep.subr.bf16.mxu0 0
  %136 = vmatpush1.bf16.msra.mxu0 %v112
  %137 = vmatprep.subr.bf16.mxu0 0
  %138 = vmatpush1.bf16.msra.mxu0 0
  %139 = vmatprep.subr.bf16.mxu0 0
  %140 = vmatpush1.bf16.msra.mxu0 0
  %141 = vmatprep.subr.bf16.mxu0 0
  %142 = vmatpush1.bf16.msra.mxu0 0
  %143 = vmatprep.subr.bf16.mxu0 0
  %144 = vmatpush1.bf16.msra.mxu0 0
  %145 = vmatprep.subr.bf16.mxu0 0
  %146 = vmatpush1.bf16.msra.mxu0 0
  %147 = vmatprep.subr.bf16.mxu0 0
  %148 = vmatpush1.bf16.msra.mxu0 0
  %149 = vmatprep.subr.bf16.mxu0 0
  %150 = vmatpush1.bf16.msra.mxu0 0
  %151 = vmatprep.subr.bf16.mxu0 0
  %152 = vmatpush1.bf16.msra.mxu0 0
  %153 = vmatprep.mubr.bf16.mxu0 0
  %154 = vmatmul.mubr.bf16.gmra.mrb[0].mxu0 %v65
  %v155 = vpop.f32.mrb[0].mxu0
  %v156 = vadd.f32 %v47, %v155
  %v157 = vpop.f32.mrb[0].mxu0
  %v158 = vpop.f32.mrb[0].mxu0
  %v159 = vadd.f32 %v47, %v158
  %v160 = vpop.f32.mrb[0].mxu0
  %161 = vmatprep.mubr.bf16.mxu0 0
  %162 = vmatmul.mubr.bf16.gmra.mrb[0].mxu0 %v66
  %v163 = vpop.f32.mrb[0].mxu0
  %v164 = vadd.f32 %v47, %v163
  %v165 = vpop.f32.mrb[0].mxu0
  %v166 = vpop.f32.mrb[0].mxu0
  %v167 = vadd.f32 %v47, %v166
  %v168 = vpop.f32.mrb[0].mxu0
  %169 = vmatprep.mubr.bf16.mxu0 0
  %170 = vmatmul.mubr.bf16.gmra.mrb[0].mxu0 %v67
  %v171 = vpop.f32.mrb[0].mxu0
  %v172 = vadd.f32 %v47, %v171
  %v173 = vpop.f32.mrb[0].mxu0
  %v174 = vpop.f32.mrb[0].mxu0
  %v175 = vadd.f32 %v47, %v174
  %v176 = vpop.f32.mrb[0].mxu0
  %177 = vmatprep.mubr.bf16.mxu0 0
  %178 = vmatmul.mubr.bf16.gmra.mrb[0].mxu0 %v68
  %v179 = vpop.f32.mrb[0].mxu0
  %v180 = vadd.f32 %v47, %v179
  %v181 = vpop.f32.mrb[0].mxu0
  %v182 = vpop.f32.mrb[0].mxu0
  %v183 = vadd.f32 %v47, %v182
  %v184 = vpop.f32.mrb[0].mxu0
  %185 = vdwg.mxu0
  %186 = vst [vmem:[%s3] sm:$0xff] %v156
  %187 = vst [vmem:[%s3 + $0x8] sm:$0xff] %v159
  %188 = vst [vmem:[%s3 + $0x10] sm:$0xff] %v164
  %189 = vst [vmem:[%s3 + $0x18] sm:$0xff] %v167
  %190 = vst [vmem:[%s3 + $0x20] sm:$0xff] %v172
  %191 = vst [vmem:[%s3 + $0x28] sm:$0xff] %v175
  %192 = vst [vmem:[%s3 + $0x30] sm:$0xff] %v180
  %193 = vst [vmem:[%s3 + $0x38] sm:$0xff] %v183
  %v194 = vadd.f32 %v156, %v159
  %v195 = vadd.f32 %v194, %v164
  %v196 = vadd.f32 %v195, %v167
  %v197 = vadd.f32 %v196, %v172
  %v198 = vadd.f32 %v197, %v175
  %v199 = vadd.f32 %v198, %v180
  %v200 = vadd.f32 %v199, %v183
  %v201 = vrot.slane %v200, 4
  %v202 = vadd.f32 %v200, %v201
  %v203 = vrot.slane %v202, 2
  %v204 = vadd.f32 %v202, %v203
  %v205 = vrot.slane %v204, 1
  %v206 = vadd.f32 %v204, %v205
  %207 = vst [vmem:[%s4] sm:$0x1] %v206
  %v208 = vmul.f32 %v156, %v156
  %v209 = vmul.f32 %v159, %v159
  %v210 = vmul.f32 %v164, %v164
  %v211 = vmul.f32 %v167, %v167
  %v212 = vmul.f32 %v172, %v172
  %v213 = vmul.f32 %v175, %v175
  %v214 = vmul.f32 %v180, %v180
  %v215 = vmul.f32 %v183, %v183
  %v216 = vadd.f32 %v208, %v209
  %v217 = vadd.f32 %v216, %v210
  %v218 = vadd.f32 %v217, %v211
  %v219 = vadd.f32 %v218, %v212
  %v220 = vadd.f32 %v219, %v213
  %v221 = vadd.f32 %v220, %v214
  %v222 = vadd.f32 %v221, %v215
  %v223 = vrot.slane %v222, 4
  %v224 = vadd.f32 %v222, %v223
  %v225 = vrot.slane %v224, 2
  %v226 = vadd.f32 %v224, %v225
  %v227 = vrot.slane %v226, 1
  %v228 = vadd.f32 %v226, %v227
  %229 = vst [vmem:[%s5] sm:$0x1] %v228
  // Predicated region
  $region14: #{rnet_not_factorized_forward.4} parent=0 // pred_check
    _
  $region15: #{rnet_not_factorized_forward.4} parent=0 // pred_check_branch
    %231 = sbr.rel (0) target = $region17
  $region16: #{rnet_not_factorized_forward.4} parent=0 // pred_region
    _
  $region17: #{rnet_not_factorized_forward.4} parent=0 // pred_fallthru
    _
  // Predicated region
  $region18: #{rnet_not_factorized_forward.4} parent=0 // pred_check
    _
  $region19: #{rnet_not_factorized_forward.4} parent=0 // pred_check_branch
    %233 = sbr.rel (0) target = $region21
  $region20: #{rnet_not_factorized_forward.4} parent=0 // pred_region
    _
  $region21: #{rnet_not_factorized_forward.4} parent=0 // pred_fallthru
    _
  // Predicated region
  $region22: #{rnet_not_factorized_forward.4} parent=0 // pred_check
    _
  $region23: #{rnet_not_factorized_forward.4} parent=0 // pred_check_branch
    %235 = sbr.rel (0) target = $region25
  $region24: #{rnet_not_factorized_forward.4} parent=0 // pred_region
    _
  $region25: #{rnet_not_factorized_forward.4} parent=0 // pred_fallthru
    _
  // Predicated region
  $region26: #{rnet_not_factorized_forward.4} parent=0 // pred_check
    _
  $region27: #{rnet_not_factorized_forward.4} parent=0 // pred_check_branch
    %237 = sbr.rel (0) target = $region29
  $region28: #{rnet_not_factorized_forward.4} parent=0 // pred_region
    _
  $region29: #{rnet_not_factorized_forward.4} parent=0 // pred_fallthru
    _
  // Predicated region
  $region30: #{rnet_not_factorized_forward.4} parent=0 // pred_check
    _
  $region31: #{rnet_not_factorized_forward.4} parent=0 // pred_check_branch
    %239 = sbr.rel (0) target = $region33
  $region32: #{rnet_not_factorized_forward.4} parent=0 // pred_region
    _
  $region33: #{rnet_not_factorized_forward.4} parent=0 // pred_fallthru
    _
  // Predicated region
  $region34: #{rnet_not_factorized_forward.4} parent=0 // pred_check
    _
  $region35: #{rnet_not_factorized_forward.4} parent=0 // pred_check_branch
    %241 = sbr.rel (0) target = $region37
  $region36: #{rnet_not_factorized_forward.4} parent=0 // pred_region
    _
  $region37: #{rnet_not_factorized_forward.4} parent=0 // pred_fallthru
    _

// kernel: rnet_not_factorized_forward.5
$region0: #{rnet_not_factorized_forward.5}
  #allocation0 [shape = 'u32[]', space=smem, size = 0x4, offset = 0x4, fixed_abs, tag = 'smem constant byte address 0x4 - core index']
  #allocation1 [shape = 'u32[144,128]{1,0:T(1,128)}', space=vmem, size = 0x12000, scoped, tag = 'internal scratch']
  %s0 = inlined_call_operand.vmem [shape: f32[2,6,16,128], index: 0, kind: input, shape index: {}]
  %s1 = inlined_call_operand.vmem [shape: f32[2,2,16,128], index: 1, kind: input, shape index: {}]
  %s2 = inlined_call_operand.vmem [shape: f32[1,128], index: 2, kind: input, shape index: {}]
  %s3 = inlined_call_operand.vmem [shape: f32[1,128], index: 3, kind: input, shape index: {}]
  %s4 = inlined_call_operand.vmem [shape: f32[1,128], index: 4, kind: input, shape index: {}]
  %s5 = inlined_call_operand.vmem [shape: f32[1,128], index: 5, kind: input, shape index: {}]
  %s6 = inlined_call_operand.vmem [shape: f32[2,8,16,128], index: 6, kind: output, shape index: {}]
  %s7 = sld [smem:[#allocation0]]
  $region57: #{rnet_not_factorized_forward.5} parent=0
    _
  %s9 = ssub.s32 1, %s7
  %s10 = scalar_select 0, %s9, %s7
  loop: start=0, step=1, limit=4
  $region2: #{rnet_not_factorized_forward.5} parent=0 // loop_pre_header
    _
  $region3: #{rnet_not_factorized_forward.5} parent=0 // loop_header
    %s12 = sphi 0, %s16
    %p13 = scmp.ge.s32.totalorder %s12, 4
    %s22 = sphi 0, %s24
    %s25 = sphi 0, %s22
    %s26 = sphi 0, %s25
    %s42 = sphi 0, %s26
    %s48 = sphi 0, %s50
    %s51 = sphi 0, %s48
    %s52 = sphi 0, %s51
    %s68 = sphi 0, %s52
    %s72 = sphi 0, %s72
    %s74 = sphi 0, %s72
    %s75 = sphi 0, %s74
    %s89 = sphi 0, %s75
    %s93 = sphi 0, %s93
    %s95 = sphi 0, %s93
    %s96 = sphi 0, %s95
    %s110 = sphi 0, %s96
    %s114 = sphi 0, %s114
    %s116 = sphi 0, %s114
    %s117 = sphi 0, %s116
    %s131 = sphi 0, %s117
    %s135 = sphi 0, %s135
    %s137 = sphi 0, %s135
    %s138 = sphi 0, %s137
    %s152 = sphi 0, %s138
    %s158 = sphi 0, %s160
    %s161 = sphi 0, %s158
    %s162 = sphi 0, %s161
    %s178 = sphi 0, %s162
  $region4: #{rnet_not_factorized_forward.5} parent=0 // loop_header_branch
    %15 = sbr.rel (%p13) target = $region8
  $region5: #{rnet_not_factorized_forward.5} parent=0 // loop_body
    %s17 = ssub.s32 %s12, 1
    %s18 = ssub.s32 %s12, 2
    %s19 = sadd.s32 %s12, 1
    %s20 = ssub.s32 %s12, %s19
    %p21 = scmp.eq.s32.totalorder %s20, 0
    %s23 = sadd.s32 %s22, 1
    %s24 = scalar_select %p21, %s22, %s23
    %p27 = pneg %p21
    %p28 = scmp.eq.s32.totalorder %s12, 1
    %p29 = por %p27, %p28
    %p30 = scmp.ne.s32.totalorder %s22, %s25
    %p31 = scmp.eq.s32.totalorder %s12, 0
    %p32 = por %p30, %p31
    %p33 = scmp.ne.s32.totalorder %s22, %s25
    %p34 = scmp.eq.s32.totalorder %s17, 1
    %p35 = por %p33, %p34
    %p36 = scmp.ne.s32.totalorder %s25, %s26
    %p37 = scmp.eq.s32.totalorder %s17, 0
    %p38 = por %p36, %p37
    %p39 = scmp.ne.s32.totalorder %s25, %s26
    %p40 = scmp.eq.s32.totalorder %s18, 1
    %p41 = por %p39, %p40
    %p43 = scmp.ne.s32.totalorder %s26, %s42
    %p44 = scmp.eq.s32.totalorder %s18, 0
    %p45 = por %p43, %p44
    %s46 = ssub.s32 %s12, %s19
    %p47 = scmp.eq.s32.totalorder %s46, 0
    %s49 = sadd.s32 %s48, 1
    %s50 = scalar_select %p47, %s48, %s49
    %p53 = pneg %p47
    %p54 = scmp.eq.s32.totalorder %s12, 1
    %p55 = por %p53, %p54
    %p56 = scmp.ne.s32.totalorder %s48, %s51
    %p57 = scmp.eq.s32.totalorder %s12, 0
    %p58 = por %p56, %p57
    %p59 = scmp.ne.s32.totalorder %s48, %s51
    %p60 = scmp.eq.s32.totalorder %s17, 1
    %p61 = por %p59, %p60
    %p62 = scmp.ne.s32.totalorder %s51, %s52
    %p63 = scmp.eq.s32.totalorder %s17, 0
    %p64 = por %p62, %p63
    %p65 = scmp.ne.s32.totalorder %s51, %s52
    %p66 = scmp.eq.s32.totalorder %s18, 1
    %p67 = por %p65, %p66
    %p69 = scmp.ne.s32.totalorder %s52, %s68
    %p70 = scmp.eq.s32.totalorder %s18, 0
    %p71 = por %p69, %p70
    %s73 = sadd.s32 %s72, 1
    %p76 = scmp.eq.s32.totalorder %s12, 1
    %p77 = scmp.ne.s32.totalorder %s72, %s74
    %p78 = scmp.eq.s32.totalorder %s12, 0
    %p79 = por %p77, %p78
    %p80 = scmp.ne.s32.totalorder %s72, %s74
    %p81 = scmp.eq.s32.totalorder %s17, 1
    %p82 = por %p80, %p81
    %p83 = scmp.ne.s32.totalorder %s74, %s75
    %p84 = scmp.eq.s32.totalorder %s17, 0
    %p85 = por %p83, %p84
    %p86 = scmp.ne.s32.totalorder %s74, %s75
    %p87 = scmp.eq.s32.totalorder %s18, 1
    %p88 = por %p86, %p87
    %p90 = scmp.ne.s32.totalorder %s75, %s89
    %p91 = scmp.eq.s32.totalorder %s18, 0
    %p92 = por %p90, %p91
    %s94 = sadd.s32 %s93, 1
    %p97 = scmp.eq.s32.totalorder %s12, 1
    %p98 = scmp.ne.s32.totalorder %s93, %s95
    %p99 = scmp.eq.s32.totalorder %s12, 0
    %p100 = por %p98, %p99
    %p101 = scmp.ne.s32.totalorder %s93, %s95
    %p102 = scmp.eq.s32.totalorder %s17, 1
    %p103 = por %p101, %p102
    %p104 = scmp.ne.s32.totalorder %s95, %s96
    %p105 = scmp.eq.s32.totalorder %s17, 0
    %p106 = por %p104, %p105
    %p107 = scmp.ne.s32.totalorder %s95, %s96
    %p108 = scmp.eq.s32.totalorder %s18, 1
    %p109 = por %p107, %p108
    %p111 = scmp.ne.s32.totalorder %s96, %s110
    %p112 = scmp.eq.s32.totalorder %s18, 0
    %p113 = por %p111, %p112
    %s115 = sadd.s32 %s114, 1
    %p118 = scmp.eq.s32.totalorder %s12, 1
    %p119 = scmp.ne.s32.totalorder %s114, %s116
    %p120 = scmp.eq.s32.totalorder %s12, 0
    %p121 = por %p119, %p120
    %p122 = scmp.ne.s32.totalorder %s114, %s116
    %p123 = scmp.eq.s32.totalorder %s17, 1
    %p124 = por %p122, %p123
    %p125 = scmp.ne.s32.totalorder %s116, %s117
    %p126 = scmp.eq.s32.totalorder %s17, 0
    %p127 = por %p125, %p126
    %p128 = scmp.ne.s32.totalorder %s116, %s117
    %p129 = scmp.eq.s32.totalorder %s18, 1
    %p130 = por %p128, %p129
    %p132 = scmp.ne.s32.totalorder %s117, %s131
    %p133 = scmp.eq.s32.totalorder %s18, 0
    %p134 = por %p132, %p133
    %s136 = sadd.s32 %s135, 1
    %p139 = scmp.eq.s32.totalorder %s12, 1
    %p140 = scmp.ne.s32.totalorder %s135, %s137
    %p141 = scmp.eq.s32.totalorder %s12, 0
    %p142 = por %p140, %p141
    %p143 = scmp.ne.s32.totalorder %s135, %s137
    %p144 = scmp.eq.s32.totalorder %s17, 1
    %p145 = por %p143, %p144
    %p146 = scmp.ne.s32.totalorder %s137, %s138
    %p147 = scmp.eq.s32.totalorder %s17, 0
    %p148 = por %p146, %p147
    %p149 = scmp.ne.s32.totalorder %s137, %s138
    %p150 = scmp.eq.s32.totalorder %s18, 1
    %p151 = por %p149, %p150
    %p153 = scmp.ne.s32.totalorder %s138, %s152
    %p154 = scmp.eq.s32.totalorder %s18, 0
    %p155 = por %p153, %p154
    %s156 = ssub.s32 %s12, %s19
    %p157 = scmp.eq.s32.totalorder %s156, 0
    %s159 = sadd.s32 %s158, 1
    %s160 = scalar_select %p157, %s158, %s159
    %p163 = pneg %p157
    %p164 = scmp.eq.s32.totalorder %s12, 1
    %p165 = por %p163, %p164
    %p166 = scmp.ne.s32.totalorder %s158, %s161
    %p167 = scmp.eq.s32.totalorder %s12, 0
    %p168 = por %p166, %p167
    %p169 = scmp.ne.s32.totalorder %s158, %s161
    %p170 = scmp.eq.s32.totalorder %s17, 1
    %p171 = por %p169, %p170
    %p172 = scmp.ne.s32.totalorder %s161, %s162
    %p173 = scmp.eq.s32.totalorder %s17, 0
    %p174 = por %p172, %p173
    %p175 = scmp.ne.s32.totalorder %s161, %s162
    %p176 = scmp.eq.s32.totalorder %s18, 1
    %p177 = por %p175, %p176
    %p179 = scmp.ne.s32.totalorder %s162, %s178
    %p180 = scmp.eq.s32.totalorder %s18, 0
    %p181 = por %p179, %p180
    %p182 = scmp.le.s32.totalorder 1, %s12
    %p183 = scmp.lt.s32.totalorder %s12, 3
    %p184 = pnand %p182, %p183
    %p185 = pneg %p184
    // Predicated region
    $region9: #{rnet_not_factorized_forward.5} parent=5 // pred_check
      _
    $region10: #{rnet_not_factorized_forward.5} parent=5 // pred_check_branch
      %187 = sbr.rel (%p184) target = $region12
    $region11: #{rnet_not_factorized_forward.5} parent=5 // pred_region
      %s188 = ssub.s32 %s12, 1
      // Predicated region
      $region13: #{rnet_not_factorized_forward.5} parent=11 // pred_check
        %p189 = pneg %p85
      $region14: #{rnet_not_factorized_forward.5} parent=11 // pred_check_branch
        %191 = sbr.rel (%p189) target = $region16
      $region15: #{rnet_not_factorized_forward.5} parent=11 // pred_region
        _
      $region16: #{rnet_not_factorized_forward.5} parent=11 // pred_fallthru
        _
      // Predicated region
      $region17: #{rnet_not_factorized_forward.5} parent=11 // pred_check
        %p192 = pneg %p106
      $region18: #{rnet_not_factorized_forward.5} parent=11 // pred_check_branch
        %194 = sbr.rel (%p192) target = $region20
      $region19: #{rnet_not_factorized_forward.5} parent=11 // pred_region
        _
      $region20: #{rnet_not_factorized_forward.5} parent=11 // pred_fallthru
        _
      // Predicated region
      $region21: #{rnet_not_factorized_forward.5} parent=11 // pred_check
        %p195 = pneg %p127
      $region22: #{rnet_not_factorized_forward.5} parent=11 // pred_check_branch
        %197 = sbr.rel (%p195) target = $region24
      $region23: #{rnet_not_factorized_forward.5} parent=11 // pred_region
        _
      $region24: #{rnet_not_factorized_forward.5} parent=11 // pred_fallthru
        _
      // Predicated region
      $region25: #{rnet_not_factorized_forward.5} parent=11 // pred_check
        %p198 = pneg %p148
      $region26: #{rnet_not_factorized_forward.5} parent=11 // pred_check_branch
        %200 = sbr.rel (%p198) target = $region28
      $region27: #{rnet_not_factorized_forward.5} parent=11 // pred_region
        _
      $region28: #{rnet_not_factorized_forward.5} parent=11 // pred_fallthru
        _
    $region12: #{rnet_not_factorized_forward.5} parent=5 // pred_fallthru
      _
    %p201 = scmp.lt.s32.totalorder %s12, 2
    // Predicated region
    $region29: #{rnet_not_factorized_forward.5} parent=5 // pred_check
      %p202 = pneg %p201
    $region30: #{rnet_not_factorized_forward.5} parent=5 // pred_check_branch
      %204 = sbr.rel (%p202) target = $region32
    $region31: #{rnet_not_factorized_forward.5} parent=5 // pred_region
      // Predicated region
      $region33: #{rnet_not_factorized_forward.5} parent=31 // pred_check
        %p205 = pneg %p32
      $region34: #{rnet_not_factorized_forward.5} parent=31 // pred_check_branch
        %207 = sbr.rel (%p205) target = $region36
      $region35: #{rnet_not_factorized_forward.5} parent=31 // pred_region
        %p208 = scmp.lt.s32.totalorder %s12, 1
        %s209 = scalar_select %p208, %s12, 1
        %s210 = smul.addr %s209, 12
        %s211 = smul.addr %s210, 8
        %s212 = scalar_lea.vmem %s0, %s211
      $region36: #{rnet_not_factorized_forward.5} parent=31 // pred_fallthru
        _
      // Predicated region
      $region37: #{rnet_not_factorized_forward.5} parent=31 // pred_check
        %p213 = pneg %p58
      $region38: #{rnet_not_factorized_forward.5} parent=31 // pred_check_branch
        %215 = sbr.rel (%p213) target = $region40
      $region39: #{rnet_not_factorized_forward.5} parent=31 // pred_region
        %p216 = scmp.lt.s32.totalorder %s12, 1
        %s217 = scalar_select %p216, %s12, 1
        %s218 = smul.addr %s217, 4
        %s219 = smul.addr %s218, 8
        %s220 = scalar_lea.vmem %s1, %s219
      $region40: #{rnet_not_factorized_forward.5} parent=31 // pred_fallthru
        _
    $region32: #{rnet_not_factorized_forward.5} parent=5 // pred_fallthru
      _
    %p221 = scmp.le.s32.totalorder 1, %s12
    %p222 = scmp.lt.s32.totalorder %s12, 3
    %p223 = pnand %p221, %p222
    %p224 = pneg %p223
    // Predicated region
    $region41: #{rnet_not_factorized_forward.5} parent=5 // pred_check
      _
    $region42: #{rnet_not_factorized_forward.5} parent=5 // pred_check_branch
      %226 = sbr.rel (%p223) target = $region44
    $region43: #{rnet_not_factorized_forward.5} parent=5 // pred_region
      %s227 = ssub.s32 %s12, 1
      %p228 = scmp.lt.s32.totalorder %s17, 1
      %s229 = scalar_select %p228, %s17, 1
      %s230 = smul.addr %s229, 12
      %s231 = smul.addr %s230, 8
      %s232 = scalar_lea.vmem %s0, %s231
      %p233 = pneg %p38
      %p234 = pneg %p35
      %p235 = scmp.lt.s32.totalorder %s17, 1
      %s236 = scalar_select %p235, %s17, 1
      %s237 = smul.addr %s236, 4
      %s238 = smul.addr %s237, 8
      %s239 = scalar_lea.vmem %s1, %s238
      %p240 = pneg %p64
      %p241 = pneg %p61
      %p242 = pneg %p85
      %p243 = pneg %p82
      %p244 = pneg %p106
      %p245 = pneg %p103
      %p246 = pneg %p127
      %p247 = pneg %p124
      %p248 = pneg %p148
      %p249 = pneg %p145
      %p250 = pneg %p174
      %p251 = pneg %p171
      %p252 = scmp.lt.s32.totalorder %s17, 1
      %s253 = scalar_select %p252, %s17, 1
      %s254 = smul.addr %s253, 16
      %s255 = smul.addr %s254, 8
      %s256 = scalar_lea.vmem %s6, %s255
      %p257 = scmp.lt.s32.totalorder %s17, 1
      %s258 = scalar_select %p257, %s17, 1
      %s259 = smul.addr %s258, 12
      %s260 = smul.addr %s259, 8
      %s261 = scalar_lea.vmem %s0, %s260
      %p262 = scmp.lt.s32.totalorder %s17, 1
      %s263 = scalar_select %p262, %s17, 1
      %s264 = smul.addr %s263, 4
      %s265 = smul.addr %s264, 8
      %s266 = scalar_lea.vmem %s1, %s265
      %p267 = scmp.lt.s32.totalorder %s17, 1
      %s268 = scalar_select %p267, %s17, 1
      %s269 = smul.addr %s268, 16
      %s270 = smul.addr %s269, 8
      %s271 = scalar_lea.vmem %s6, %s270
      %v272 = vld [vmem:[%s261] sm:$0xff]
      %v273 = vld [vmem:[%s261 + $0x8] sm:$0xff]
      %v274 = vld [vmem:[%s261 + $0x10] sm:$0xff]
      %v275 = vld [vmem:[%s261 + $0x18] sm:$0xff]
      %v276 = vld [vmem:[%s261 + $0x20] sm:$0xff]
      %v277 = vld [vmem:[%s261 + $0x28] sm:$0xff]
      %v278 = vld [vmem:[%s261 + $0x30] sm:$0xff]
      %v279 = vld [vmem:[%s261 + $0x38] sm:$0xff]
      %v280 = vld [vmem:[%s261 + $0x40] sm:$0xff]
      %v281 = vld [vmem:[%s261 + $0x48] sm:$0xff]
      %v282 = vld [vmem:[%s261 + $0x50] sm:$0xff]
      %v283 = vld [vmem:[%s261 + $0x58] sm:$0xff]
      %v284 = vld [vmem:[%s2] sm:$0x1]
      %v286 = vlaneseq
      %v287 = vshrl.u32 %v286, 7
      %v288 = vsub.s32 0, %v287
      %v289 = vrot.slane %v284, %v288
      %v291 = vmul.f32 %v272, %v289
      %v292 = vmul.f32 %v273, %v289
      %v293 = vmul.f32 %v274, %v289
      %v294 = vmul.f32 %v275, %v289
      %v295 = vmul.f32 %v276, %v289
      %v296 = vmul.f32 %v277, %v289
      %v297 = vmul.f32 %v278, %v289
      %v298 = vmul.f32 %v279, %v289
      %v299 = vmul.f32 %v280, %v289
      %v300 = vmul.f32 %v281, %v289
      %v301 = vmul.f32 %v282, %v289
      %v302 = vmul.f32 %v283, %v289
      %v303 = vld [vmem:[%s3] sm:$0x1]
      %v305 = vlaneseq
      %v306 = vshrl.u32 %v305, 7
      %v307 = vsub.s32 0, %v306
      %v308 = vrot.slane %v303, %v307
      %v310 = vadd.f32 %v291, %v308
      %v311 = vadd.f32 %v292, %v308
      %v312 = vadd.f32 %v293, %v308
      %v313 = vadd.f32 %v294, %v308
      %v314 = vadd.f32 %v295, %v308
      %v315 = vadd.f32 %v296, %v308
      %v316 = vadd.f32 %v297, %v308
      %v317 = vadd.f32 %v298, %v308
      %v318 = vadd.f32 %v299, %v308
      %v319 = vadd.f32 %v300, %v308
      %v320 = vadd.f32 %v301, %v308
      %v321 = vadd.f32 %v302, %v308
      %vm322 = vcmp.ge.f32.partialorder %v310, 0.0
      %vm323 = vcmp.ge.f32.partialorder %v311, 0.0
      %vm324 = vcmp.ge.f32.partialorder %v312, 0.0
      %vm325 = vcmp.ge.f32.partialorder %v313, 0.0
      %vm326 = vcmp.ge.f32.partialorder %v314, 0.0
      %vm327 = vcmp.ge.f32.partialorder %v315, 0.0
      %vm328 = vcmp.ge.f32.partialorder %v316, 0.0
      %vm329 = vcmp.ge.f32.partialorder %v317, 0.0
      %vm330 = vcmp.ge.f32.partialorder %v318, 0.0
      %vm331 = vcmp.ge.f32.partialorder %v319, 0.0
      %vm332 = vcmp.ge.f32.partialorder %v320, 0.0
      %vm333 = vcmp.ge.f32.partialorder %v321, 0.0
      %v334 = vmul.f32 %v310, 0.01
      %v335 = vmul.f32 %v311, 0.01
      %v336 = vmul.f32 %v312, 0.01
      %v337 = vmul.f32 %v313, 0.01
      %v338 = vmul.f32 %v314, 0.01
      %v339 = vmul.f32 %v315, 0.01
      %v340 = vmul.f32 %v316, 0.01
      %v341 = vmul.f32 %v317, 0.01
      %v342 = vmul.f32 %v318, 0.01
      %v343 = vmul.f32 %v319, 0.01
      %v344 = vmul.f32 %v320, 0.01
      %v345 = vmul.f32 %v321, 0.01
      %v346 = vsel %vm322, %v310, %v334
      %v347 = vsel %vm323, %v311, %v335
      %v348 = vsel %vm324, %v312, %v336
      %v349 = vsel %vm325, %v313, %v337
      %v350 = vsel %vm326, %v314, %v338
      %v351 = vsel %vm327, %v315, %v339
      %v352 = vsel %vm328, %v316, %v340
      %v353 = vsel %vm329, %v317, %v341
      %v354 = vsel %vm330, %v318, %v342
      %v355 = vsel %vm331, %v319, %v343
      %v356 = vsel %vm332, %v320, %v344
      %v357 = vsel %vm333, %v321, %v345
      %v358 = vld [vmem:[%s266] sm:$0xff]
      %v359 = vld [vmem:[%s266 + $0x8] sm:$0xff]
      %v360 = vld [vmem:[%s266 + $0x10] sm:$0xff]
      %v361 = vld [vmem:[%s266 + $0x18] sm:$0xff]
      %v362 = vld [vmem:[%s4] sm:$0x1]
      %v364 = vlaneseq
      %v365 = vshrl.u32 %v364, 7
      %v366 = vsub.s32 0, %v365
      %v367 = vrot.slane %v362, %v366
      %v369 = vmul.f32 %v358, %v367
      %v370 = vmul.f32 %v359, %v367
      %v371 = vmul.f32 %v360, %v367
      %v372 = vmul.f32 %v361, %v367
      %v373 = vld [vmem:[%s5] sm:$0x1]
      %v375 = vlaneseq
      %v376 = vshrl.u32 %v375, 7
      %v377 = vsub.s32 0, %v376
      %v378 = vrot.slane %v373, %v377
      %v380 = vadd.f32 %v369, %v378
      %v381 = vadd.f32 %v370, %v378
      %v382 = vadd.f32 %v371, %v378
      %v383 = vadd.f32 %v372, %v378
      %vm384 = vcmp.ge.f32.partialorder %v380, 0.0
      %vm385 = vcmp.ge.f32.partialorder %v381, 0.0
      %vm386 = vcmp.ge.f32.partialorder %v382, 0.0
      %vm387 = vcmp.ge.f32.partialorder %v383, 0.0
      %v388 = vmul.f32 %v380, 0.01
      %v389 = vmul.f32 %v381, 0.01
      %v390 = vmul.f32 %v382, 0.01
      %v391 = vmul.f32 %v383, 0.01
      %v392 = vsel %vm384, %v380, %v388
      %v393 = vsel %vm385, %v381, %v389
      %v394 = vsel %vm386, %v382, %v390
      %v395 = vsel %vm387, %v383, %v391
      %396 = vst [vmem:[%s271] sm:$0xff] %v346
      %397 = vst [vmem:[%s271 + $0x8] sm:$0xff] %v347
      %398 = vst [vmem:[%s271 + $0x10] sm:$0xff] %v348
      %399 = vst [vmem:[%s271 + $0x18] sm:$0xff] %v349
      %400 = vst [vmem:[%s271 + $0x20] sm:$0xff] %v350
      %401 = vst [vmem:[%s271 + $0x28] sm:$0xff] %v351
      %402 = vst [vmem:[%s271 + $0x30] sm:$0xff] %v352
      %403 = vst [vmem:[%s271 + $0x38] sm:$0xff] %v353
      %404 = vst [vmem:[%s271 + $0x40] sm:$0xff] %v354
      %405 = vst [vmem:[%s271 + $0x48] sm:$0xff] %v355
      %v406 = vsub.f32 %v356, %v392
      %v407 = vsub.f32 %v357, %v393
      %v408 = vsub.f32 %v356, %v394
      %v409 = vsub.f32 %v357, %v395
      %s410 = scalar_lea.vmem %s271, 80
      %411 = vst [vmem:[%s410] sm:$0xff] %v406
      %412 = vst [vmem:[%s410 + $0x8] sm:$0xff] %v407
      %413 = vst [vmem:[%s410 + $0x10] sm:$0xff] %v408
      %414 = vst [vmem:[%s410 + $0x18] sm:$0xff] %v409
      %s415 = scalar_lea.vmem %s271, 112
      %416 = vst [vmem:[%s415] sm:$0xff] %v408
      %417 = vst [vmem:[%s415 + $0x8] sm:$0xff] %v409
      %p418 = scmp.lt.s32.totalorder %s17, 1
      %s419 = scalar_select %p418, %s17, 1
      %s420 = smul.addr %s419, 16
      %s421 = smul.addr %s420, 8
      %s422 = scalar_lea.vmem %s6, %s421
      // Predicated region
      $region45: #{rnet_not_factorized_forward.5} parent=43 // pred_check
        %p423 = pneg %p171
      $region46: #{rnet_not_factorized_forward.5} parent=43 // pred_check_branch
        %425 = sbr.rel (%p423) target = $region48
      $region47: #{rnet_not_factorized_forward.5} parent=43 // pred_region
        _
      $region48: #{rnet_not_factorized_forward.5} parent=43 // pred_fallthru
        _
    $region44: #{rnet_not_factorized_forward.5} parent=5 // pred_fallthru
      _
    %p426 = scmp.le.s32.totalorder 2, %s12
    // Predicated region
    $region49: #{rnet_not_factorized_forward.5} parent=5 // pred_check
      %p427 = pneg %p426
    $region50: #{rnet_not_factorized_forward.5} parent=5 // pred_check_branch
      %429 = sbr.rel (%p427) target = $region52
    $region51: #{rnet_not_factorized_forward.5} parent=5 // pred_region
      %s430 = ssub.s32 %s12, 2
      // Predicated region
      $region53: #{rnet_not_factorized_forward.5} parent=51 // pred_check
        %p431 = pneg %p177
      $region54: #{rnet_not_factorized_forward.5} parent=51 // pred_check_branch
        %433 = sbr.rel (%p431) target = $region56
      $region55: #{rnet_not_factorized_forward.5} parent=51 // pred_region
        %p434 = scmp.lt.s32.totalorder %s18, 1
        %s435 = scalar_select %p434, %s18, 1
        %s436 = smul.addr %s435, 16
        %s437 = smul.addr %s436, 8
        %s438 = scalar_lea.vmem %s6, %s437
      $region56: #{rnet_not_factorized_forward.5} parent=51 // pred_fallthru
        _
    $region52: #{rnet_not_factorized_forward.5} parent=5 // pred_fallthru
      _
  $region6: #{rnet_not_factorized_forward.5} parent=0 // loop_footer
    %s16 = sadd.s32 1, %s12
  $region7: #{rnet_not_factorized_forward.5} parent=0 // loop_footer_branch
    %11 = sbr.rel target = $region3
  $region8: #{rnet_not_factorized_forward.5} parent=0 // loop_exit
    _

</llo_original>
